<compile_context>
chip_gen: v6e
topology: v6e:2x2x1
jax: 0.10.0
libtpu: 0.0.40
codegen_flags: <defaults>
</compile_context>

<pallas_src>
import jax
import jax.numpy as jnp
from jax.experimental import pallas as pl
from jax.experimental.pallas import tpu as pltpu

_BN_EPS = 1e-5


# ----------------------------------------------------------------------------
# small helpers
# ----------------------------------------------------------------------------
def _ceil_to(a, b):
    return (a + b - 1) // b * b


def _bn_fold(bn):
    """Fold inference-mode BatchNorm2d into per-channel scale/shift."""
    scale = bn["gamma"] / jnp.sqrt(bn["var"] + _BN_EPS)
    shift = bn["beta"] - bn["mean"] * scale
    return scale.astype(jnp.float32), shift.astype(jnp.float32)


def _shuffle_perm(C, groups):
    """channel_shuffle(x, groups)[:, o] == x[:, perm[o]]  (static python ints)."""
    cpg = C // groups
    return tuple((o % groups) * cpg + (o // groups) for o in range(C))


def _dense_grouped_weight(w, groups):
    """(C_out, C_in//g, 1, 1) grouped-1x1 weights -> dense (C_out, C_in)."""
    c_out, cpg = int(w.shape[0]), int(w.shape[1])
    opg = c_out // groups
    dense = jnp.zeros((c_out, cpg * groups), jnp.float32)
    w2 = w.reshape(c_out, cpg).astype(jnp.float32)
    for g in range(groups):
        dense = dense.at[g * opg:(g + 1) * opg, g * cpg:(g + 1) * cpg].set(
            w2[g * opg:(g + 1) * opg, :])
    return dense


def _interp_matrix(n_out, n_in):
    """(n_out, n_in) linear-interpolation matrix, align_corners=True."""
    if n_in == 1:
        return jnp.ones((n_out, 1), jnp.float32)
    pos = jnp.arange(n_out, dtype=jnp.float32) * (n_in - 1) / (n_out - 1)
    lo = jnp.clip(jnp.floor(pos).astype(jnp.int32), 0, n_in - 2)
    frac = pos - lo.astype(jnp.float32)
    rows = jnp.arange(n_out)
    a = jnp.zeros((n_out, n_in), jnp.float32)
    a = a.at[rows, lo].set(1.0 - frac)
    a = a.at[rows, lo + 1].add(frac)
    return a


def _bilinear_up2(x):
    """nn.Upsample(scale_factor=2, mode='bilinear', align_corners=True), NCHW."""
    n, c, h, w = x.shape
    ah = _interp_matrix(2 * h, h)
    aw = _interp_matrix(2 * w, w)
    return jnp.einsum("nchw,Hh,Ww->ncHW", x, ah, aw)


# ----------------------------------------------------------------------------
# fused Pallas kernel: concat -> (shuffled) DWSG -> DWSG
# ----------------------------------------------------------------------------
def _make_up_dwsg_kernel(H, W, c_half, c1, c_mid, c_out, pad):
    M = H * W

    def _dw3x3(base, w_ref, b_ref, mask_l, mask_r):
        """Depthwise 3x3 (+ folded BN scale) + shift + ReLU on a zero-bordered
        flattened image `base` of shape (c, 2*pad + M), channels on sublanes."""
        wt = w_ref[...]                                 # (c, 9)
        acc = None
        t = 0
        for dh in (-1, 0, 1):
            for dwc in (-1, 0, 1):
                start = pad + dh * W + dwc              # static; |off| <= W+1 <= pad
                s = base[:, start:start + M]            # (c, M) shifted view
                if dwc == -1:                           # source column w-1 invalid at w == 0
                    s = jnp.where(mask_l, s, 0.0)
                elif dwc == 1:                          # source column w+1 invalid at w == W-1
                    s = jnp.where(mask_r, s, 0.0)
                term = wt[:, t:t + 1] * s               # one lane-broadcast FMA per tap
                acc = term if acc is None else acc + term
                t += 1
        return jnp.maximum(acc + b_ref[...], 0.0)

    def _g1x1(a, w_ref, b_ref):
        """Grouped 1x1 (dense block-diagonal weights, BN scale folded) + ReLU."""
        c_in = a.shape[0]
        wt = w_ref[...]                                 # (c_o, c_in)
        if c_in >= 32:
            # TODO(synk): wide-channel reuse should hit the MXU; unreached at C<=8.
            acc = jnp.dot(wt, a, preferred_element_type=jnp.float32)
        else:
            acc = None
            for ci in range(c_in):
                term = wt[:, ci:ci + 1] * a[ci:ci + 1, :]
                acc = term if acc is None else acc + term
        return jnp.maximum(acc + b_ref[...], 0.0)

    def kernel(w1d_ref, b1d_ref, w1p_ref, b1p_ref,
               w2d_ref, b2d_ref, w2p_ref, b2p_ref,
               x2_ref, x1_ref, o_ref, pad_ref):
        lane = jax.lax.broadcasted_iota(jnp.int32, (1, M), 1)
        wpos = lane % W
        mask_l = wpos != 0
        mask_r = wpos != (W - 1)

        # Zero the scratch every step: the halo borders must be exact zeros, and
        # re-zeroing per step stays correct when a megacore shards the batch axis.
        pad_ref[...] = jnp.zeros_like(pad_ref)

        # concat([x2, x1_up], dim=1) folded in: both halves land on adjacent
        # sublane rows of the zero-bordered scratch.  channel_shuffle(groups=2)
        # was folded into a static permutation of the stage-1 weights (wrapper).
        pad_ref[0:c_half, pl.ds(pad, M)] = x2_ref[...].astype(jnp.float32)
        pad_ref[c_half:c1, pl.ds(pad, M)] = x1_ref[...].astype(jnp.float32)

        # DWSGConv block 1 (C -> C//2); intermediates stay on-chip.
        a = _dw3x3(pad_ref[0:c1, :], w1d_ref, b1d_ref, mask_l, mask_r)
        a = _g1x1(a, w1p_ref, b1p_ref)

        # DWSGConv block 2 (C//2 -> C_out); reuse the zero-bordered scratch.
        pad_ref[0:c_mid, pl.ds(pad, M)] = a
        a = _dw3x3(pad_ref[0:c_mid, :], w2d_ref, b2d_ref, mask_l, mask_r)
        a = _g1x1(a, w2p_ref, b2p_ref)

        o_ref[...] = a.astype(o_ref.dtype)              # full lane-dense store

    return kernel


def _fused_up_conv(x2f, x1f, weights, H, W):
    """x2f/x1f: (N, C/2, H*W) flattened activations; weights: 8 small 2-D arrays."""
    (w1d, b1d, w1p, b1p, w2d, b2d, w2p, b2p) = weights
    N, c_half, M = x2f.shape
    c1 = 2 * c_half
    c_mid = int(w1p.shape[0])
    c_out = int(w2p.shape[0])
    pad = _ceil_to(W + 1, 128)               # halo >= W+1 and lane-aligned center
    c_scr = max(c1, c_mid)

    kernel = _make_up_dwsg_kernel(H, W, c_half, c1, c_mid, c_out, pad)
    weight_specs = [pl.BlockSpec(tuple(int(d) for d in w.shape), lambda n: (0, 0))
                    for w in weights]

    return pl.pallas_call(
        kernel,
        out_shape=jax.ShapeDtypeStruct((N, c_out, M), x2f.dtype),
        grid=(N,),
        in_specs=weight_specs + [
            pl.BlockSpec((None, c_half, M), lambda n: (n, 0, 0)),
            pl.BlockSpec((None, c_half, M), lambda n: (n, 0, 0)),
        ],
        out_specs=pl.BlockSpec((None, c_out, M), lambda n: (n, 0, 0)),
        scratch_shapes=[pltpu.VMEM((c_scr, 2 * pad + M), jnp.float32)],
        compiler_params=pltpu.CompilerParams(dimension_semantics=("parallel",)),
    )(w1d, b1d, w1p, b1p, w2d, b2d, w2p, b2p, x2f, x1f)


@jax.jit
def up_forward(x1, x2, params):
    """Up.forward(x1, x2) with bilinear=True (inference-mode BatchNorm)."""
    # TODO(synk): the bilinear x2 upsample (align_corners=True) stays a tiny XLA
    # einsum on the pre-concat tensor; everything downstream (pad/concat/shuffle/
    # dw3x3/BN/ReLU/grouped-1x1/BN/ReLU x2) runs in ONE fused Pallas kernel.
    x1u = _bilinear_up2(x1)
    dy = x2.shape[2] - x1u.shape[2]
    dx = x2.shape[3] - x1u.shape[3]
    if dy or dx:
        x1u = jnp.pad(x1u, ((0, 0), (0, 0),
                            (dy // 2, dy - dy // 2), (dx // 2, dx - dx // 2)))

    N, c_half, H, W = x2.shape
    c1 = 2 * c_half
    b1, b2 = params["b1"], params["b2"]

    # Fold inference BatchNorm into the conv weights (scale) + per-channel shift.
    s1a, h1a = _bn_fold(b1["bn1"]); s1b, h1b = _bn_fold(b1["bn2"])
    s2a, h2a = _bn_fold(b2["bn1"]); s2b, h2b = _bn_fold(b2["bn2"])
    w1d = b1["dw_w"].reshape(c1, 9).astype(jnp.float32) * s1a[:, None]
    w1p = _dense_grouped_weight(b1["pw_w"], groups=4) * s1b[:, None]
    w2d = b2["dw_w"].reshape(-1, 9).astype(jnp.float32) * s2a[:, None]
    w2p = _dense_grouped_weight(b2["pw_w"], groups=4) * s2b[:, None]

    # Fold channel_shuffle(groups=2): the kernel sees plain concat order
    # [x2, x1u]; shuffled channel o reads concat channel perm[o], so permute the
    # stage-1 depthwise rows/bias and the stage-1 1x1 *columns* by the inverse
    # map.  Downstream channel order is unchanged.
    perm = _shuffle_perm(c1, 2)
    inv = jnp.array(tuple(perm.index(u) for u in range(c1)), jnp.int32)
    w1d = w1d[inv]
    b1d = h1a[inv][:, None]
    w1p = w1p[:, inv]

    y = _fused_up_conv(
        x2.reshape(N, c_half, H * W),          # free NCHW-contiguous views
        x1u.reshape(N, c_half, H * W),
        (w1d, b1d, w1p, h1b[:, None],
         w2d, h2a[:, None], w2p, h2b[:, None]),
        H, W)
    return y.reshape(N, -1, H, W)


# ----------------------------------------------------------------------------
# pure-JAX reference (literal translation of the PyTorch module)
# ----------------------------------------------------------------------------
def _bn_ref(x, bn):
    inv = bn["gamma"] / jnp.sqrt(bn["var"] + _BN_EPS)
    return ((x - bn["mean"][None, :, None, None]) * inv[None, :, None, None]
            + bn["beta"][None, :, None, None])


def _channel_shuffle_ref(x, groups):
    n, c, h, w = x.shape
    x = x.reshape(n, groups, c // groups, h, w)
    x = jnp.transpose(x, (0, 2, 1, 3, 4))
    return x.reshape(n, c, h, w)


def _dwsg_ref(x, bp, groups=4):
    c = x.shape[1]
    y = jax.lax.conv_general_dilated(
        x, bp["dw_w"], (1, 1), ((1, 1), (1, 1)),
        dimension_numbers=("NCHW", "OIHW", "NCHW"), feature_group_count=c)
    y = jax.nn.relu(_bn_ref(y, bp["bn1"]))
    y = jax.lax.conv_general_dilated(
        y, bp["pw_w"], (1, 1), ((0, 0), (0, 0)),
        dimension_numbers=("NCHW", "OIHW", "NCHW"), feature_group_count=groups)
    return jax.nn.relu(_bn_ref(y, bp["bn2"]))


def reference_up(x1, x2, params):
    x1u = _bilinear_up2(x1)
    dy = x2.shape[2] - x1u.shape[2]
    dx = x2.shape[3] - x1u.shape[3]
    x1u = jnp.pad(x1u, ((0, 0), (0, 0),
                        (dy // 2, dy - dy // 2), (dx // 2, dx - dx // 2)))
    x = jnp.concatenate([x2, x1u], axis=1)
    x = _channel_shuffle_ref(x, 2)
    x = _dwsg_ref(x, params["b1"])
    x = _dwsg_ref(x, params["b2"])
    return x


# ----------------------------------------------------------------------------
# demo
# ----------------------------------------------------------------------------
if __name__ == "__main__":
    key = jax.random.PRNGKey(0)
    ks = jax.random.split(key, 4)

    N = 2
    in_channels, out_channels = 8, 8          # Up(8, 8, bilinear=True)
    mid_channels = in_channels // 2           # 4
    H1 = W1 = 8                               # x1 spatial (pre-upsample)
    H2 = W2 = 16                              # x2 (skip connection) spatial

    x1 = jax.random.normal(ks[0], (N, in_channels // 2, H1, W1), jnp.float32)
    x2 = jax.random.normal(ks[1], (N, in_channels // 2, H2, W2), jnp.float32)

    def make_bn(k, c):
        k1, k2, k3, k4 = jax.random.split(k, 4)
        return dict(gamma=1.0 + 0.1 * jax.random.normal(k1, (c,), jnp.float32),
                    beta=0.1 * jax.random.normal(k2, (c,), jnp.float32),
                    mean=0.1 * jax.random.normal(k3, (c,), jnp.float32),
                    var=jax.random.uniform(k4, (c,), jnp.float32, 0.5, 1.5))

    def make_dwsg(k, c_in, c_out, groups=4):
        k1, k2, k3, k4 = jax.random.split(k, 4)
        return dict(dw_w=0.3 * jax.random.normal(k1, (c_in, 1, 3, 3), jnp.float32),
                    bn1=make_bn(k2, c_in),
                    pw_w=0.3 * jax.random.normal(
                        k3, (c_out, c_in // groups, 1, 1), jnp.float32),
                    bn2=make_bn(k4, c_out))

    params = dict(b1=make_dwsg(ks[2], in_channels, mid_channels),
                  b2=make_dwsg(ks[3], mid_channels, out_channels))

    y = up_forward(x1, x2, params)
    jax.block_until_ready(y)
    assert y.shape == (N, out_channels, H2, W2), y.shape

    y_ref = reference_up(x1, x2, params)
    err = float(jnp.max(jnp.abs(y - y_ref)))
    assert jnp.allclose(y, y_ref, atol=1e-4, rtol=1e-4), err

    print("KERNEL_OK")
</pallas_src>

<mosaic_0001>
module attributes {stable_mosaic.version = 11 : i64} {
  func.func private @main(%arg0: i32) attributes {dimension_semantics = [#tpu.dimension_semantics<core_parallel>], iteration_bounds = array<i64: 2>, tpu.core_type = #tpu.core_type<sc_scalar_subcore>, window_params = []} {
    return
  }
}

module attributes {stable_mosaic.version = 11 : i64} {
  func.func private @main(%arg0: i32) attributes {dimension_semantics = [#tpu.dimension_semantics<core_parallel>], iteration_bounds = array<i64: 2>, tpu.core_type = #tpu.core_type<sc_scalar_subcore>, window_params = []} {
    return
  }
}

module attributes {stable_mosaic.version = 11 : i64} {
  func.func @kernel(%arg0: i32, %arg1: memref<8x9xf32, #tpu.memory_space<vmem>>, %arg2: memref<8x1xf32, #tpu.memory_space<vmem>>, %arg3: memref<4x8xf32, #tpu.memory_space<vmem>>, %arg4: memref<4x1xf32, #tpu.memory_space<vmem>>, %arg5: memref<4x9xf32, #tpu.memory_space<vmem>>, %arg6: memref<4x1xf32, #tpu.memory_space<vmem>>, %arg7: memref<8x4xf32, #tpu.memory_space<vmem>>, %arg8: memref<8x1xf32, #tpu.memory_space<vmem>>, %arg9: memref<1x4x256xf32, #tpu.memory_space<vmem>>, %arg10: memref<1x4x256xf32, #tpu.memory_space<vmem>>, %arg11: memref<1x8x256xf32, #tpu.memory_space<vmem>>, %arg12: memref<8x512xf32, #tpu.memory_space<vmem>>) attributes {dimension_semantics = [#tpu.dimension_semantics<parallel>], iteration_bounds = array<i64: 2>, scalar_prefetch = 0 : i64, scratch_operands = 1 : i64, tpu.core_type = #tpu.core_type<tc>, window_params = [{pipeline_mode = #tpu.pipeline_mode<synchronous>, transform_indices = @transform_0, window_bounds = array<i64: 8, 9>}, {pipeline_mode = #tpu.pipeline_mode<synchronous>, transform_indices = @transform_1, window_bounds = array<i64: 8, 1>}, {pipeline_mode = #tpu.pipeline_mode<synchronous>, transform_indices = @transform_2, window_bounds = array<i64: 4, 8>}, {pipeline_mode = #tpu.pipeline_mode<synchronous>, transform_indices = @transform_3, window_bounds = array<i64: 4, 1>}, {pipeline_mode = #tpu.pipeline_mode<synchronous>, transform_indices = @transform_4, window_bounds = array<i64: 4, 9>}, {pipeline_mode = #tpu.pipeline_mode<synchronous>, transform_indices = @transform_5, window_bounds = array<i64: 4, 1>}, {pipeline_mode = #tpu.pipeline_mode<synchronous>, transform_indices = @transform_6, window_bounds = array<i64: 8, 4>}, {pipeline_mode = #tpu.pipeline_mode<synchronous>, transform_indices = @transform_7, window_bounds = array<i64: 8, 1>}, {transform_indices = @transform_8, window_bounds = array<i64: 1, 4, 256>}, {transform_indices = @transform_9, window_bounds = array<i64: 1, 4, 256>}, {transform_indices = @transform_10, window_bounds = array<i64: 1, 8, 256>}]} {
    %0 = tpu.iota {dimensions = array<i32: 1>} : vector<1x256xi32>
    %c16_i32 = arith.constant 16 : i32
    %c0_i32 = arith.constant 0 : i32
    %1 = arith.cmpi eq, %c16_i32, %c0_i32 : i32
    %c1_i32 = arith.constant 1 : i32
    %2 = arith.select %1, %c1_i32, %c16_i32 : i32
    %3 = vector.broadcast %2 : i32 to vector<1x256xi32>
    %4 = arith.remsi %0, %3 : vector<1x256xi32>
    %c0_i32_0 = arith.constant 0 : i32
    %5 = vector.broadcast %c0_i32_0 : i32 to vector<1x256xi32>
    %6 = arith.cmpi ne, %4, %5 : vector<1x256xi32>
    %c0_i32_1 = arith.constant 0 : i32
    %7 = vector.broadcast %c0_i32_1 : i32 to vector<1x256xi32>
    %8 = arith.cmpi slt, %4, %7 : vector<1x256xi32>
    %c0_i32_2 = arith.constant 0 : i32
    %9 = arith.cmpi slt, %2, %c0_i32_2 : i32
    %10 = vector.broadcast %9 : i1 to vector<1x256xi1>
    %11 = vector.broadcast %10 : vector<1x256xi1> to vector<1x256xi1>
    %12 = arith.xori %8, %11 : vector<1x256xi1>
    %13 = arith.andi %12, %6 : vector<1x256xi1>
    %14 = vector.broadcast %2 : i32 to vector<1x256xi32>
    %15 = arith.addi %4, %14 : vector<1x256xi32>
    %16 = arith.select %13, %15, %4 : vector<1x256xi1>, vector<1x256xi32>
    %c0_i32_3 = arith.constant 0 : i32
    %17 = vector.broadcast %c0_i32_3 : i32 to vector<1x256xi32>
    %18 = arith.cmpi ne, %16, %17 : vector<1x256xi32>
    %c15_i32 = arith.constant 15 : i32
    %19 = vector.broadcast %c15_i32 : i32 to vector<1x256xi32>
    %20 = arith.cmpi ne, %16, %19 : vector<1x256xi32>
    %cst = arith.constant 0.000000e+00 : f32
    %21 = vector.broadcast %cst : f32 to vector<8x512xf32>
    %c0 = arith.constant 0 : index
    %c0_4 = arith.constant 0 : index
    %22 = vector.load %arg12[%c0, %c0_4] : memref<8x512xf32, #tpu.memory_space<vmem>>, vector<8x512xf32>
    tpu.vector_store %arg12[%c0, %c0_4], %21 {strides = array<i32>} : memref<8x512xf32, #tpu.memory_space<vmem>>, vector<8x512xf32>,
    %c0_5 = arith.constant 0 : index
    %c0_6 = arith.constant 0 : index
    %c0_7 = arith.constant 0 : index
    %23 = vector.load %arg9[%c0_5, %c0_6, %c0_7] : memref<1x4x256xf32, #tpu.memory_space<vmem>>, vector<1x4x256xf32>
    %24 = vector.shape_cast %23 : vector<1x4x256xf32> to vector<4x256xf32>
    %c0_8 = arith.constant 0 : index
    %c128 = arith.constant 128 : index
    %25 = vector.load %arg12[%c0_8, %c128] : memref<8x512xf32, #tpu.memory_space<vmem>>, vector<4x256xf32>
    tpu.vector_store %arg12[%c0_8, %c128], %24 {strides = array<i32>} : memref<8x512xf32, #tpu.memory_space<vmem>>, vector<4x256xf32>,
    %c0_9 = arith.constant 0 : index
    %c0_10 = arith.constant 0 : index
    %c0_11 = arith.constant 0 : index
    %26 = vector.load %arg10[%c0_9, %c0_10, %c0_11] : memref<1x4x256xf32, #tpu.memory_space<vmem>>, vector<1x4x256xf32>
    %27 = vector.shape_cast %26 : vector<1x4x256xf32> to vector<4x256xf32>
    %c4 = arith.constant 4 : index
    %c128_12 = arith.constant 128 : index
    %28 = vector.load %arg12[%c4, %c128_12] : memref<8x512xf32, #tpu.memory_space<vmem>>, vector<4x256xf32>
    tpu.vector_store %arg12[%c4, %c128_12], %27 {strides = array<i32>} : memref<8x512xf32, #tpu.memory_space<vmem>>, vector<4x256xf32>,
    %c0_13 = arith.constant 0 : index
    %c0_14 = arith.constant 0 : index
    %29 = vector.load %arg12[%c0_13, %c0_14] : memref<8x512xf32, #tpu.memory_space<vmem>>, vector<8x512xf32>
    %c0_15 = arith.constant 0 : index
    %c0_16 = arith.constant 0 : index
    %30 = vector.load %arg1[%c0_15, %c0_16] : memref<8x9xf32, #tpu.memory_space<vmem>>, vector<8x9xf32>
    %31 = vector.extract_strided_slice %29 {offsets = [0, 111], sizes = [8, 256], strides = [1, 1]} : vector<8x512xf32> to vector<8x256xf32>
    %cst_17 = arith.constant 0.000000e+00 : f32
    %32 = vector.shape_cast %18 : vector<1x256xi1> to vector<1x256xi1>
    %33 = vector.broadcast %32 : vector<1x256xi1> to vector<8x256xi1>
    %34 = vector.broadcast %cst_17 : f32 to vector<8x256xf32>
    %35 = arith.select %33, %31, %34 : vector<8x256xi1>, vector<8x256xf32>
    %36 = vector.extract_strided_slice %30 {offsets = [0, 0], sizes = [8, 1], strides = [1, 1]} : vector<8x9xf32> to vector<8x1xf32>
    %37 = vector.broadcast %36 : vector<8x1xf32> to vector<8x256xf32>
    %38 = arith.mulf %37, %35 : vector<8x256xf32>
    %39 = vector.extract_strided_slice %29 {offsets = [0, 112], sizes = [8, 256], strides = [1, 1]} : vector<8x512xf32> to vector<8x256xf32>
    %40 = vector.extract_strided_slice %30 {offsets = [0, 1], sizes = [8, 1], strides = [1, 1]} : vector<8x9xf32> to vector<8x1xf32>
    %41 = vector.broadcast %40 : vector<8x1xf32> to vector<8x256xf32>
    %42 = arith.mulf %41, %39 : vector<8x256xf32>
    %43 = arith.addf %38, %42 : vector<8x256xf32>
    %44 = vector.extract_strided_slice %29 {offsets = [0, 113], sizes = [8, 256], strides = [1, 1]} : vector<8x512xf32> to vector<8x256xf32>
    %cst_18 = arith.constant 0.000000e+00 : f32
    %45 = vector.shape_cast %20 : vector<1x256xi1> to vector<1x256xi1>
    %46 = vector.broadcast %45 : vector<1x256xi1> to vector<8x256xi1>
    %47 = vector.broadcast %cst_18 : f32 to vector<8x256xf32>
    %48 = arith.select %46, %44, %47 : vector<8x256xi1>, vector<8x256xf32>
    %49 = vector.extract_strided_slice %30 {offsets = [0, 2], sizes = [8, 1], strides = [1, 1]} : vector<8x9xf32> to vector<8x1xf32>
    %50 = vector.broadcast %49 : vector<8x1xf32> to vector<8x256xf32>
    %51 = arith.mulf %50, %48 : vector<8x256xf32>
    %52 = arith.addf %43, %51 : vector<8x256xf32>
    %53 = vector.extract_strided_slice %29 {offsets = [0, 127], sizes = [8, 256], strides = [1, 1]} : vector<8x512xf32> to vector<8x256xf32>
    %cst_19 = arith.constant 0.000000e+00 : f32
    %54 = vector.shape_cast %18 : vector<1x256xi1> to vector<1x256xi1>
    %55 = vector.broadcast %54 : vector<1x256xi1> to vector<8x256xi1>
    %56 = vector.broadcast %cst_19 : f32 to vector<8x256xf32>
    %57 = arith.select %55, %53, %56 : vector<8x256xi1>, vector<8x256xf32>
    %58 = vector.extract_strided_slice %30 {offsets = [0, 3], sizes = [8, 1], strides = [1, 1]} : vector<8x9xf32> to vector<8x1xf32>
    %59 = vector.broadcast %58 : vector<8x1xf32> to vector<8x256xf32>
    %60 = arith.mulf %59, %57 : vector<8x256xf32>
    %61 = arith.addf %52, %60 : vector<8x256xf32>
    %62 = vector.extract_strided_slice %29 {offsets = [0, 128], sizes = [8, 256], strides = [1, 1]} : vector<8x512xf32> to vector<8x256xf32>
    %63 = vector.extract_strided_slice %30 {offsets = [0, 4], sizes = [8, 1], strides = [1, 1]} : vector<8x9xf32> to vector<8x1xf32>
    %64 = vector.broadcast %63 : vector<8x1xf32> to vector<8x256xf32>
    %65 = arith.mulf %64, %62 : vector<8x256xf32>
    %66 = arith.addf %61, %65 : vector<8x256xf32>
    %67 = vector.extract_strided_slice %29 {offsets = [0, 129], sizes = [8, 256], strides = [1, 1]} : vector<8x512xf32> to vector<8x256xf32>
    %cst_20 = arith.constant 0.000000e+00 : f32
    %68 = vector.shape_cast %20 : vector<1x256xi1> to vector<1x256xi1>
    %69 = vector.broadcast %68 : vector<1x256xi1> to vector<8x256xi1>
    %70 = vector.broadcast %cst_20 : f32 to vector<8x256xf32>
    %71 = arith.select %69, %67, %70 : vector<8x256xi1>, vector<8x256xf32>
    %72 = vector.extract_strided_slice %30 {offsets = [0, 5], sizes = [8, 1], strides = [1, 1]} : vector<8x9xf32> to vector<8x1xf32>
    %73 = vector.broadcast %72 : vector<8x1xf32> to vector<8x256xf32>
    %74 = arith.mulf %73, %71 : vector<8x256xf32>
    %75 = arith.addf %66, %74 : vector<8x256xf32>
    %76 = vector.extract_strided_slice %29 {offsets = [0, 143], sizes = [8, 256], strides = [1, 1]} : vector<8x512xf32> to vector<8x256xf32>
    %cst_21 = arith.constant 0.000000e+00 : f32
    %77 = vector.shape_cast %18 : vector<1x256xi1> to vector<1x256xi1>
    %78 = vector.broadcast %77 : vector<1x256xi1> to vector<8x256xi1>
    %79 = vector.broadcast %cst_21 : f32 to vector<8x256xf32>
    %80 = arith.select %78, %76, %79 : vector<8x256xi1>, vector<8x256xf32>
    %81 = vector.extract_strided_slice %30 {offsets = [0, 6], sizes = [8, 1], strides = [1, 1]} : vector<8x9xf32> to vector<8x1xf32>
    %82 = vector.broadcast %81 : vector<8x1xf32> to vector<8x256xf32>
    %83 = arith.mulf %82, %80 : vector<8x256xf32>
    %84 = arith.addf %75, %83 : vector<8x256xf32>
    %85 = vector.extract_strided_slice %29 {offsets = [0, 144], sizes = [8, 256], strides = [1, 1]} : vector<8x512xf32> to vector<8x256xf32>
    %86 = vector.extract_strided_slice %30 {offsets = [0, 7], sizes = [8, 1], strides = [1, 1]} : vector<8x9xf32> to vector<8x1xf32>
    %87 = vector.broadcast %86 : vector<8x1xf32> to vector<8x256xf32>
    %88 = arith.mulf %87, %85 : vector<8x256xf32>
    %89 = arith.addf %84, %88 : vector<8x256xf32>
    %90 = vector.extract_strided_slice %29 {offsets = [0, 145], sizes = [8, 256], strides = [1, 1]} : vector<8x512xf32> to vector<8x256xf32>
    %cst_22 = arith.constant 0.000000e+00 : f32
    %91 = vector.shape_cast %20 : vector<1x256xi1> to vector<1x256xi1>
    %92 = vector.broadcast %91 : vector<1x256xi1> to vector<8x256xi1>
    %93 = vector.broadcast %cst_22 : f32 to vector<8x256xf32>
    %94 = arith.select %92, %90, %93 : vector<8x256xi1>, vector<8x256xf32>
    %95 = vector.extract_strided_slice %30 {offsets = [0, 8], sizes = [8, 1], strides = [1, 1]} : vector<8x9xf32> to vector<8x1xf32>
    %96 = vector.broadcast %95 : vector<8x1xf32> to vector<8x256xf32>
    %97 = arith.mulf %96, %94 : vector<8x256xf32>
    %98 = arith.addf %89, %97 : vector<8x256xf32>
    %c0_23 = arith.constant 0 : index
    %c0_24 = arith.constant 0 : index
    %99 = vector.load %arg2[%c0_23, %c0_24] : memref<8x1xf32, #tpu.memory_space<vmem>>, vector<8x1xf32>
    %100 = vector.broadcast %99 : vector<8x1xf32> to vector<8x256xf32>
    %101 = arith.addf %98, %100 : vector<8x256xf32>
    %cst_25 = arith.constant 0.000000e+00 : f32
    %102 = vector.broadcast %cst_25 : f32 to vector<8x256xf32>
    %103 = arith.maximumf %101, %102 : vector<8x256xf32>
    %c0_26 = arith.constant 0 : index
    %c0_27 = arith.constant 0 : index
    %104 = vector.load %arg3[%c0_26, %c0_27] : memref<4x8xf32, #tpu.memory_space<vmem>>, vector<4x8xf32>
    %105 = vector.extract_strided_slice %104 {offsets = [0, 0], sizes = [4, 1], strides = [1, 1]} : vector<4x8xf32> to vector<4x1xf32>
    %106 = vector.extract_strided_slice %103 {offsets = [0, 0], sizes = [1, 256], strides = [1, 1]} : vector<8x256xf32> to vector<1x256xf32>
    %107 = vector.broadcast %105 : vector<4x1xf32> to vector<4x256xf32>
    %108 = vector.broadcast %106 : vector<1x256xf32> to vector<4x256xf32>
    %109 = arith.mulf %107, %108 : vector<4x256xf32>
    %110 = vector.extract_strided_slice %104 {offsets = [0, 1], sizes = [4, 1], strides = [1, 1]} : vector<4x8xf32> to vector<4x1xf32>
    %111 = vector.extract_strided_slice %103 {offsets = [1, 0], sizes = [1, 256], strides = [1, 1]} : vector<8x256xf32> to vector<1x256xf32>
    %112 = vector.broadcast %110 : vector<4x1xf32> to vector<4x256xf32>
    %113 = vector.broadcast %111 : vector<1x256xf32> to vector<4x256xf32>
    %114 = arith.mulf %112, %113 : vector<4x256xf32>
    %115 = arith.addf %109, %114 : vector<4x256xf32>
    %116 = vector.extract_strided_slice %104 {offsets = [0, 2], sizes = [4, 1], strides = [1, 1]} : vector<4x8xf32> to vector<4x1xf32>
    %117 = vector.extract_strided_slice %103 {offsets = [2, 0], sizes = [1, 256], strides = [1, 1]} : vector<8x256xf32> to vector<1x256xf32>
    %118 = vector.broadcast %116 : vector<4x1xf32> to vector<4x256xf32>
    %119 = vector.broadcast %117 : vector<1x256xf32> to vector<4x256xf32>
    %120 = arith.mulf %118, %119 : vector<4x256xf32>
    %121 = arith.addf %115, %120 : vector<4x256xf32>
    %122 = vector.extract_strided_slice %104 {offsets = [0, 3], sizes = [4, 1], strides = [1, 1]} : vector<4x8xf32> to vector<4x1xf32>
    %123 = vector.extract_strided_slice %103 {offsets = [3, 0], sizes = [1, 256], strides = [1, 1]} : vector<8x256xf32> to vector<1x256xf32>
    %124 = vector.broadcast %122 : vector<4x1xf32> to vector<4x256xf32>
    %125 = vector.broadcast %123 : vector<1x256xf32> to vector<4x256xf32>
    %126 = arith.mulf %124, %125 : vector<4x256xf32>
    %127 = arith.addf %121, %126 : vector<4x256xf32>
    %128 = vector.extract_strided_slice %104 {offsets = [0, 4], sizes = [4, 1], strides = [1, 1]} : vector<4x8xf32> to vector<4x1xf32>
    %129 = vector.extract_strided_slice %103 {offsets = [4, 0], sizes = [1, 256], strides = [1, 1]} : vector<8x256xf32> to vector<1x256xf32>
    %130 = vector.broadcast %128 : vector<4x1xf32> to vector<4x256xf32>
    %131 = vector.broadcast %129 : vector<1x256xf32> to vector<4x256xf32>
    %132 = arith.mulf %130, %131 : vector<4x256xf32>
    %133 = arith.addf %127, %132 : vector<4x256xf32>
    %134 = vector.extract_strided_slice %104 {offsets = [0, 5], sizes = [4, 1], strides = [1, 1]} : vector<4x8xf32> to vector<4x1xf32>
    %135 = vector.extract_strided_slice %103 {offsets = [5, 0], sizes = [1, 256], strides = [1, 1]} : vector<8x256xf32> to vector<1x256xf32>
    %136 = vector.broadcast %134 : vector<4x1xf32> to vector<4x256xf32>
    %137 = vector.broadcast %135 : vector<1x256xf32> to vector<4x256xf32>
    %138 = arith.mulf %136, %137 : vector<4x256xf32>
    %139 = arith.addf %133, %138 : vector<4x256xf32>
    %140 = vector.extract_strided_slice %104 {offsets = [0, 6], sizes = [4, 1], strides = [1, 1]} : vector<4x8xf32> to vector<4x1xf32>
    %141 = vector.extract_strided_slice %103 {offsets = [6, 0], sizes = [1, 256], strides = [1, 1]} : vector<8x256xf32> to vector<1x256xf32>
    %142 = vector.broadcast %140 : vector<4x1xf32> to vector<4x256xf32>
    %143 = vector.broadcast %141 : vector<1x256xf32> to vector<4x256xf32>
    %144 = arith.mulf %142, %143 : vector<4x256xf32>
    %145 = arith.addf %139, %144 : vector<4x256xf32>
    %146 = vector.extract_strided_slice %104 {offsets = [0, 7], sizes = [4, 1], strides = [1, 1]} : vector<4x8xf32> to vector<4x1xf32>
    %147 = vector.extract_strided_slice %103 {offsets = [7, 0], sizes = [1, 256], strides = [1, 1]} : vector<8x256xf32> to vector<1x256xf32>
    %148 = vector.broadcast %146 : vector<4x1xf32> to vector<4x256xf32>
    %149 = vector.broadcast %147 : vector<1x256xf32> to vector<4x256xf32>
    %150 = arith.mulf %148, %149 : vector<4x256xf32>
    %151 = arith.addf %145, %150 : vector<4x256xf32>
    %c0_28 = arith.constant 0 : index
    %c0_29 = arith.constant 0 : index
    %152 = vector.load %arg4[%c0_28, %c0_29] : memref<4x1xf32, #tpu.memory_space<vmem>>, vector<4x1xf32>
    %153 = vector.broadcast %152 : vector<4x1xf32> to vector<4x256xf32>
    %154 = arith.addf %151, %153 : vector<4x256xf32>
    %cst_30 = arith.constant 0.000000e+00 : f32
    %155 = vector.broadcast %cst_30 : f32 to vector<4x256xf32>
    %156 = arith.maximumf %154, %155 : vector<4x256xf32>
    %c0_31 = arith.constant 0 : index
    %c128_32 = arith.constant 128 : index
    %157 = vector.load %arg12[%c0_31, %c128_32] : memref<8x512xf32, #tpu.memory_space<vmem>>, vector<4x256xf32>
    tpu.vector_store %arg12[%c0_31, %c128_32], %156 {strides = array<i32>} : memref<8x512xf32, #tpu.memory_space<vmem>>, vector<4x256xf32>,
    %c0_33 = arith.constant 0 : index
    %c0_34 = arith.constant 0 : index
    %158 = vector.load %arg12[%c0_33, %c0_34] : memref<8x512xf32, #tpu.memory_space<vmem>>, vector<4x512xf32>
    %c0_35 = arith.constant 0 : index
    %c0_36 = arith.constant 0 : index
    %159 = vector.load %arg5[%c0_35, %c0_36] : memref<4x9xf32, #tpu.memory_space<vmem>>, vector<4x9xf32>
    %160 = vector.extract_strided_slice %158 {offsets = [0, 111], sizes = [4, 256], strides = [1, 1]} : vector<4x512xf32> to vector<4x256xf32>
    %cst_37 = arith.constant 0.000000e+00 : f32
    %161 = vector.shape_cast %18 : vector<1x256xi1> to vector<1x256xi1>
    %162 = vector.broadcast %161 : vector<1x256xi1> to vector<4x256xi1>
    %163 = vector.broadcast %cst_37 : f32 to vector<4x256xf32>
    %164 = arith.select %162, %160, %163 : vector<4x256xi1>, vector<4x256xf32>
    %165 = vector.extract_strided_slice %159 {offsets = [0, 0], sizes = [4, 1], strides = [1, 1]} : vector<4x9xf32> to vector<4x1xf32>
    %166 = vector.broadcast %165 : vector<4x1xf32> to vector<4x256xf32>
    %167 = arith.mulf %166, %164 : vector<4x256xf32>
    %168 = vector.extract_strided_slice %158 {offsets = [0, 112], sizes = [4, 256], strides = [1, 1]} : vector<4x512xf32> to vector<4x256xf32>
    %169 = vector.extract_strided_slice %159 {offsets = [0, 1], sizes = [4, 1], strides = [1, 1]} : vector<4x9xf32> to vector<4x1xf32>
    %170 = vector.broadcast %169 : vector<4x1xf32> to vector<4x256xf32>
    %171 = arith.mulf %170, %168 : vector<4x256xf32>
    %172 = arith.addf %167, %171 : vector<4x256xf32>
    %173 = vector.extract_strided_slice %158 {offsets = [0, 113], sizes = [4, 256], strides = [1, 1]} : vector<4x512xf32> to vector<4x256xf32>
    %cst_38 = arith.constant 0.000000e+00 : f32
    %174 = vector.shape_cast %20 : vector<1x256xi1> to vector<1x256xi1>
    %175 = vector.broadcast %174 : vector<1x256xi1> to vector<4x256xi1>
    %176 = vector.broadcast %cst_38 : f32 to vector<4x256xf32>
    %177 = arith.select %175, %173, %176 : vector<4x256xi1>, vector<4x256xf32>
    %178 = vector.extract_strided_slice %159 {offsets = [0, 2], sizes = [4, 1], strides = [1, 1]} : vector<4x9xf32> to vector<4x1xf32>
    %179 = vector.broadcast %178 : vector<4x1xf32> to vector<4x256xf32>
    %180 = arith.mulf %179, %177 : vector<4x256xf32>
    %181 = arith.addf %172, %180 : vector<4x256xf32>
    %182 = vector.extract_strided_slice %158 {offsets = [0, 127], sizes = [4, 256], strides = [1, 1]} : vector<4x512xf32> to vector<4x256xf32>
    %cst_39 = arith.constant 0.000000e+00 : f32
    %183 = vector.shape_cast %18 : vector<1x256xi1> to vector<1x256xi1>
    %184 = vector.broadcast %183 : vector<1x256xi1> to vector<4x256xi1>
    %185 = vector.broadcast %cst_39 : f32 to vector<4x256xf32>
    %186 = arith.select %184, %182, %185 : vector<4x256xi1>, vector<4x256xf32>
    %187 = vector.extract_strided_slice %159 {offsets = [0, 3], sizes = [4, 1], strides = [1, 1]} : vector<4x9xf32> to vector<4x1xf32>
    %188 = vector.broadcast %187 : vector<4x1xf32> to vector<4x256xf32>
    %189 = arith.mulf %188, %186 : vector<4x256xf32>
    %190 = arith.addf %181, %189 : vector<4x256xf32>
    %191 = vector.extract_strided_slice %158 {offsets = [0, 128], sizes = [4, 256], strides = [1, 1]} : vector<4x512xf32> to vector<4x256xf32>
    %192 = vector.extract_strided_slice %159 {offsets = [0, 4], sizes = [4, 1], strides = [1, 1]} : vector<4x9xf32> to vector<4x1xf32>
    %193 = vector.broadcast %192 : vector<4x1xf32> to vector<4x256xf32>
    %194 = arith.mulf %193, %191 : vector<4x256xf32>
    %195 = arith.addf %190, %194 : vector<4x256xf32>
    %196 = vector.extract_strided_slice %158 {offsets = [0, 129], sizes = [4, 256], strides = [1, 1]} : vector<4x512xf32> to vector<4x256xf32>
    %cst_40 = arith.constant 0.000000e+00 : f32
    %197 = vector.shape_cast %20 : vector<1x256xi1> to vector<1x256xi1>
    %198 = vector.broadcast %197 : vector<1x256xi1> to vector<4x256xi1>
    %199 = vector.broadcast %cst_40 : f32 to vector<4x256xf32>
    %200 = arith.select %198, %196, %199 : vector<4x256xi1>, vector<4x256xf32>
    %201 = vector.extract_strided_slice %159 {offsets = [0, 5], sizes = [4, 1], strides = [1, 1]} : vector<4x9xf32> to vector<4x1xf32>
    %202 = vector.broadcast %201 : vector<4x1xf32> to vector<4x256xf32>
    %203 = arith.mulf %202, %200 : vector<4x256xf32>
    %204 = arith.addf %195, %203 : vector<4x256xf32>
    %205 = vector.extract_strided_slice %158 {offsets = [0, 143], sizes = [4, 256], strides = [1, 1]} : vector<4x512xf32> to vector<4x256xf32>
    %cst_41 = arith.constant 0.000000e+00 : f32
    %206 = vector.shape_cast %18 : vector<1x256xi1> to vector<1x256xi1>
    %207 = vector.broadcast %206 : vector<1x256xi1> to vector<4x256xi1>
    %208 = vector.broadcast %cst_41 : f32 to vector<4x256xf32>
    %209 = arith.select %207, %205, %208 : vector<4x256xi1>, vector<4x256xf32>
    %210 = vector.extract_strided_slice %159 {offsets = [0, 6], sizes = [4, 1], strides = [1, 1]} : vector<4x9xf32> to vector<4x1xf32>
    %211 = vector.broadcast %210 : vector<4x1xf32> to vector<4x256xf32>
    %212 = arith.mulf %211, %209 : vector<4x256xf32>
    %213 = arith.addf %204, %212 : vector<4x256xf32>
    %214 = vector.extract_strided_slice %158 {offsets = [0, 144], sizes = [4, 256], strides = [1, 1]} : vector<4x512xf32> to vector<4x256xf32>
    %215 = vector.extract_strided_slice %159 {offsets = [0, 7], sizes = [4, 1], strides = [1, 1]} : vector<4x9xf32> to vector<4x1xf32>
    %216 = vector.broadcast %215 : vector<4x1xf32> to vector<4x256xf32>
    %217 = arith.mulf %216, %214 : vector<4x256xf32>
    %218 = arith.addf %213, %217 : vector<4x256xf32>
    %219 = vector.extract_strided_slice %158 {offsets = [0, 145], sizes = [4, 256], strides = [1, 1]} : vector<4x512xf32> to vector<4x256xf32>
    %cst_42 = arith.constant 0.000000e+00 : f32
    %220 = vector.shape_cast %20 : vector<1x256xi1> to vector<1x256xi1>
    %221 = vector.broadcast %220 : vector<1x256xi1> to vector<4x256xi1>
    %222 = vector.broadcast %cst_42 : f32 to vector<4x256xf32>
    %223 = arith.select %221, %219, %222 : vector<4x256xi1>, vector<4x256xf32>
    %224 = vector.extract_strided_slice %159 {offsets = [0, 8], sizes = [4, 1], strides = [1, 1]} : vector<4x9xf32> to vector<4x1xf32>
    %225 = vector.broadcast %224 : vector<4x1xf32> to vector<4x256xf32>
    %226 = arith.mulf %225, %223 : vector<4x256xf32>
    %227 = arith.addf %218, %226 : vector<4x256xf32>
    %c0_43 = arith.constant 0 : index
    %c0_44 = arith.constant 0 : index
    %228 = vector.load %arg6[%c0_43, %c0_44] : memref<4x1xf32, #tpu.memory_space<vmem>>, vector<4x1xf32>
    %229 = vector.broadcast %228 : vector<4x1xf32> to vector<4x256xf32>
    %230 = arith.addf %227, %229 : vector<4x256xf32>
    %cst_45 = arith.constant 0.000000e+00 : f32
    %231 = vector.broadcast %cst_45 : f32 to vector<4x256xf32>
    %232 = arith.maximumf %230, %231 : vector<4x256xf32>
    %c0_46 = arith.constant 0 : index
    %c0_47 = arith.constant 0 : index
    %233 = vector.load %arg7[%c0_46, %c0_47] : memref<8x4xf32, #tpu.memory_space<vmem>>, vector<8x4xf32>
    %234 = vector.extract_strided_slice %233 {offsets = [0, 0], sizes = [8, 1], strides = [1, 1]} : vector<8x4xf32> to vector<8x1xf32>
    %235 = vector.extract_strided_slice %232 {offsets = [0, 0], sizes = [1, 256], strides = [1, 1]} : vector<4x256xf32> to vector<1x256xf32>
    %236 = vector.broadcast %234 : vector<8x1xf32> to vector<8x256xf32>
    %237 = vector.broadcast %235 : vector<1x256xf32> to vector<8x256xf32>
    %238 = arith.mulf %236, %237 : vector<8x256xf32>
    %239 = vector.extract_strided_slice %233 {offsets = [0, 1], sizes = [8, 1], strides = [1, 1]} : vector<8x4xf32> to vector<8x1xf32>
    %240 = vector.extract_strided_slice %232 {offsets = [1, 0], sizes = [1, 256], strides = [1, 1]} : vector<4x256xf32> to vector<1x256xf32>
    %241 = vector.broadcast %239 : vector<8x1xf32> to vector<8x256xf32>
    %242 = vector.broadcast %240 : vector<1x256xf32> to vector<8x256xf32>
    %243 = arith.mulf %241, %242 : vector<8x256xf32>
    %244 = arith.addf %238, %243 : vector<8x256xf32>
    %245 = vector.extract_strided_slice %233 {offsets = [0, 2], sizes = [8, 1], strides = [1, 1]} : vector<8x4xf32> to vector<8x1xf32>
    %246 = vector.extract_strided_slice %232 {offsets = [2, 0], sizes = [1, 256], strides = [1, 1]} : vector<4x256xf32> to vector<1x256xf32>
    %247 = vector.broadcast %245 : vector<8x1xf32> to vector<8x256xf32>
    %248 = vector.broadcast %246 : vector<1x256xf32> to vector<8x256xf32>
    %249 = arith.mulf %247, %248 : vector<8x256xf32>
    %250 = arith.addf %244, %249 : vector<8x256xf32>
    %251 = vector.extract_strided_slice %233 {offsets = [0, 3], sizes = [8, 1], strides = [1, 1]} : vector<8x4xf32> to vector<8x1xf32>
    %252 = vector.extract_strided_slice %232 {offsets = [3, 0], sizes = [1, 256], strides = [1, 1]} : vector<4x256xf32> to vector<1x256xf32>
    %253 = vector.broadcast %251 : vector<8x1xf32> to vector<8x256xf32>
    %254 = vector.broadcast %252 : vector<1x256xf32> to vector<8x256xf32>
    %255 = arith.mulf %253, %254 : vector<8x256xf32>
    %256 = arith.addf %250, %255 : vector<8x256xf32>
    %c0_48 = arith.constant 0 : index
    %c0_49 = arith.constant 0 : index
    %257 = vector.load %arg8[%c0_48, %c0_49] : memref<8x1xf32, #tpu.memory_space<vmem>>, vector<8x1xf32>
    %258 = vector.broadcast %257 : vector<8x1xf32> to vector<8x256xf32>
    %259 = arith.addf %256, %258 : vector<8x256xf32>
    %cst_50 = arith.constant 0.000000e+00 : f32
    %260 = vector.broadcast %cst_50 : f32 to vector<8x256xf32>
    %261 = arith.maximumf %259, %260 : vector<8x256xf32>
    %c0_51 = arith.constant 0 : index
    %c0_52 = arith.constant 0 : index
    %c0_53 = arith.constant 0 : index
    %262 = vector.load %arg11[%c0_51, %c0_52, %c0_53] : memref<1x8x256xf32, #tpu.memory_space<vmem>>, vector<1x8x256xf32>
    %263 = vector.shape_cast %262 : vector<1x8x256xf32> to vector<8x256xf32>
    %264 = vector.shape_cast %261 : vector<8x256xf32> to vector<1x8x256xf32>
    tpu.vector_store %arg11[%c0_51, %c0_52, %c0_53], %264 {strides = array<i32>} : memref<1x8x256xf32, #tpu.memory_space<vmem>>, vector<1x8x256xf32>,
    return
  }
  func.func @transform_0(%arg0: i32) -> (i32, i32) {
    %c0_i32 = arith.constant 0 : i32
    %c0_i32_0 = arith.constant 0 : i32
    %c0_i32_1 = arith.constant 0 : i32
    return %c0_i32, %c0_i32_0 : i32, i32
  }
  func.func @transform_1(%arg0: i32) -> (i32, i32) {
    %c0_i32 = arith.constant 0 : i32
    %c0_i32_0 = arith.constant 0 : i32
    %c0_i32_1 = arith.constant 0 : i32
    return %c0_i32, %c0_i32_0 : i32, i32
  }
  func.func @transform_2(%arg0: i32) -> (i32, i32) {
    %c0_i32 = arith.constant 0 : i32
    %c0_i32_0 = arith.constant 0 : i32
    %c0_i32_1 = arith.constant 0 : i32
    return %c0_i32, %c0_i32_0 : i32, i32
  }
  func.func @transform_3(%arg0: i32) -> (i32, i32) {
    %c0_i32 = arith.constant 0 : i32
    %c0_i32_0 = arith.constant 0 : i32
    %c0_i32_1 = arith.constant 0 : i32
    return %c0_i32, %c0_i32_0 : i32, i32
  }
  func.func @transform_4(%arg0: i32) -> (i32, i32) {
    %c0_i32 = arith.constant 0 : i32
    %c0_i32_0 = arith.constant 0 : i32
    %c0_i32_1 = arith.constant 0 : i32
    return %c0_i32, %c0_i32_0 : i32, i32
  }
  func.func @transform_5(%arg0: i32) -> (i32, i32) {
    %c0_i32 = arith.constant 0 : i32
    %c0_i32_0 = arith.constant 0 : i32
    %c0_i32_1 = arith.constant 0 : i32
    return %c0_i32, %c0_i32_0 : i32, i32
  }
  func.func @transform_6(%arg0: i32) -> (i32, i32) {
    %c0_i32 = arith.constant 0 : i32
    %c0_i32_0 = arith.constant 0 : i32
    %c0_i32_1 = arith.constant 0 : i32
    return %c0_i32, %c0_i32_0 : i32, i32
  }
  func.func @transform_7(%arg0: i32) -> (i32, i32) {
    %c0_i32 = arith.constant 0 : i32
    %c0_i32_0 = arith.constant 0 : i32
    %c0_i32_1 = arith.constant 0 : i32
    return %c0_i32, %c0_i32_0 : i32, i32
  }
  func.func @transform_8(%arg0: i32) -> (i32, i32, i32) {
    %c0_i32 = arith.constant 0 : i32
    %c0_i32_0 = arith.constant 0 : i32
    %c0_i32_1 = arith.constant 0 : i32
    return %arg0, %c0_i32, %c0_i32_0 : i32, i32, i32
  }
  func.func @transform_9(%arg0: i32) -> (i32, i32, i32) {
    %c0_i32 = arith.constant 0 : i32
    %c0_i32_0 = arith.constant 0 : i32
    %c0_i32_1 = arith.constant 0 : i32
    return %arg0, %c0_i32, %c0_i32_0 : i32, i32, i32
  }
  func.func @transform_10(%arg0: i32) -> (i32, i32, i32) {
    %c0_i32 = arith.constant 0 : i32
    %c0_i32_0 = arith.constant 0 : i32
    %c0_i32_1 = arith.constant 0 : i32
    return %arg0, %c0_i32, %c0_i32_0 : i32, i32, i32
  }
}

</mosaic_0001>

<llo_original>
// kernel: up_forward.1
$region0: #{up_forward.1}
  #allocation0 [shape = 'u32[]', space=smem, size = 0x4, offset = 0x4, fixed_abs, tag = 'smem constant byte address 0x4 - core index']
  #allocation1 [shape = 'u32[144,128]{1,0:T(1,128)}', space=vmem, size = 0x12000, scoped, tag = 'internal scratch']
  #allocation2 [shape = 'f32[8,512]{1,0:T(8,128)}', space=vmem, size = 0x4000, scoped, tag = 'scratch operand']
  %s0 = inlined_call_operand.vmem [shape: f32[8,9], index: 0, kind: input, shape index: {}]
  %s1 = inlined_call_operand.vmem [shape: f32[8,1], index: 1, kind: input, shape index: {}]
  %s2 = inlined_call_operand.vmem [shape: f32[4,8], index: 2, kind: input, shape index: {}]
  %s3 = inlined_call_operand.vmem [shape: f32[4,1], index: 3, kind: input, shape index: {}]
  %s4 = inlined_call_operand.vmem [shape: f32[4,9], index: 4, kind: input, shape index: {}]
  %s5 = inlined_call_operand.vmem [shape: f32[4,1], index: 5, kind: input, shape index: {}]
  %s6 = inlined_call_operand.vmem [shape: f32[8,4], index: 6, kind: input, shape index: {}]
  %s7 = inlined_call_operand.vmem [shape: f32[8,1], index: 7, kind: input, shape index: {}]
  %s8 = inlined_call_operand.vmem [shape: f32[2,4,256], index: 8, kind: input, shape index: {}]
  %s9 = inlined_call_operand.vmem [shape: f32[2,4,256], index: 9, kind: input, shape index: {}]
  %s10 = inlined_call_operand.vmem [shape: f32[2,8,256], index: 10, kind: output, shape index: {}]
  %s11 = sld [smem:[#allocation0]]
  $region73: #{up_forward.1} parent=0
    _
  %s13 = ssub.s32 1, %s11
  %s14 = scalar_select 0, %s13, %s11
  loop: start=0, step=1, limit=4
  $region2: #{up_forward.1} parent=0 // loop_pre_header
    _
  $region3: #{up_forward.1} parent=0 // loop_header
    %s16 = sphi 0, %s20
    %p17 = scmp.ge.s32.totalorder %s16, 4
    %s24 = sphi 0, %s24
    %s26 = sphi 0, %s24
    %s27 = sphi 0, %s26
    %s41 = sphi 0, %s27
    %s45 = sphi 0, %s45
    %s47 = sphi 0, %s45
    %s48 = sphi 0, %s47
    %s62 = sphi 0, %s48
    %s66 = sphi 0, %s66
    %s68 = sphi 0, %s66
    %s69 = sphi 0, %s68
    %s83 = sphi 0, %s69
    %s87 = sphi 0, %s87
    %s89 = sphi 0, %s87
    %s90 = sphi 0, %s89
    %s104 = sphi 0, %s90
    %s108 = sphi 0, %s108
    %s110 = sphi 0, %s108
    %s111 = sphi 0, %s110
    %s125 = sphi 0, %s111
    %s129 = sphi 0, %s129
    %s131 = sphi 0, %s129
    %s132 = sphi 0, %s131
    %s146 = sphi 0, %s132
    %s150 = sphi 0, %s150
    %s152 = sphi 0, %s150
    %s153 = sphi 0, %s152
    %s167 = sphi 0, %s153
    %s171 = sphi 0, %s171
    %s173 = sphi 0, %s171
    %s174 = sphi 0, %s173
    %s188 = sphi 0, %s174
    %s194 = sphi 0, %s196
    %s197 = sphi 0, %s194
    %s198 = sphi 0, %s197
    %s214 = sphi 0, %s198
    %s220 = sphi 0, %s222
    %s223 = sphi 0, %s220
    %s224 = sphi 0, %s223
    %s240 = sphi 0, %s224
    %s246 = sphi 0, %s248
    %s249 = sphi 0, %s246
    %s250 = sphi 0, %s249
    %s266 = sphi 0, %s250
  $region4: #{up_forward.1} parent=0 // loop_header_branch
    %19 = sbr.rel (%p17) target = $region8
  $region5: #{up_forward.1} parent=0 // loop_body
    %s21 = ssub.s32 %s16, 1
    %s22 = ssub.s32 %s16, 2
    %s23 = sadd.s32 %s16, 1
    %s25 = sadd.s32 %s24, 1
    %p28 = scmp.eq.s32.totalorder %s16, 1
    %p29 = scmp.ne.s32.totalorder %s24, %s26
    %p30 = scmp.eq.s32.totalorder %s16, 0
    %p31 = por %p29, %p30
    %p32 = scmp.ne.s32.totalorder %s24, %s26
    %p33 = scmp.eq.s32.totalorder %s21, 1
    %p34 = por %p32, %p33
    %p35 = scmp.ne.s32.totalorder %s26, %s27
    %p36 = scmp.eq.s32.totalorder %s21, 0
    %p37 = por %p35, %p36
    %p38 = scmp.ne.s32.totalorder %s26, %s27
    %p39 = scmp.eq.s32.totalorder %s22, 1
    %p40 = por %p38, %p39
    %p42 = scmp.ne.s32.totalorder %s27, %s41
    %p43 = scmp.eq.s32.totalorder %s22, 0
    %p44 = por %p42, %p43
    %s46 = sadd.s32 %s45, 1
    %p49 = scmp.eq.s32.totalorder %s16, 1
    %p50 = scmp.ne.s32.totalorder %s45, %s47
    %p51 = scmp.eq.s32.totalorder %s16, 0
    %p52 = por %p50, %p51
    %p53 = scmp.ne.s32.totalorder %s45, %s47
    %p54 = scmp.eq.s32.totalorder %s21, 1
    %p55 = por %p53, %p54
    %p56 = scmp.ne.s32.totalorder %s47, %s48
    %p57 = scmp.eq.s32.totalorder %s21, 0
    %p58 = por %p56, %p57
    %p59 = scmp.ne.s32.totalorder %s47, %s48
    %p60 = scmp.eq.s32.totalorder %s22, 1
    %p61 = por %p59, %p60
    %p63 = scmp.ne.s32.totalorder %s48, %s62
    %p64 = scmp.eq.s32.totalorder %s22, 0
    %p65 = por %p63, %p64
    %s67 = sadd.s32 %s66, 1
    %p70 = scmp.eq.s32.totalorder %s16, 1
    %p71 = scmp.ne.s32.totalorder %s66, %s68
    %p72 = scmp.eq.s32.totalorder %s16, 0
    %p73 = por %p71, %p72
    %p74 = scmp.ne.s32.totalorder %s66, %s68
    %p75 = scmp.eq.s32.totalorder %s21, 1
    %p76 = por %p74, %p75
    %p77 = scmp.ne.s32.totalorder %s68, %s69
    %p78 = scmp.eq.s32.totalorder %s21, 0
    %p79 = por %p77, %p78
    %p80 = scmp.ne.s32.totalorder %s68, %s69
    %p81 = scmp.eq.s32.totalorder %s22, 1
    %p82 = por %p80, %p81
    %p84 = scmp.ne.s32.totalorder %s69, %s83
    %p85 = scmp.eq.s32.totalorder %s22, 0
    %p86 = por %p84, %p85
    %s88 = sadd.s32 %s87, 1
    %p91 = scmp.eq.s32.totalorder %s16, 1
    %p92 = scmp.ne.s32.totalorder %s87, %s89
    %p93 = scmp.eq.s32.totalorder %s16, 0
    %p94 = por %p92, %p93
    %p95 = scmp.ne.s32.totalorder %s87, %s89
    %p96 = scmp.eq.s32.totalorder %s21, 1
    %p97 = por %p95, %p96
    %p98 = scmp.ne.s32.totalorder %s89, %s90
    %p99 = scmp.eq.s32.totalorder %s21, 0
    %p100 = por %p98, %p99
    %p101 = scmp.ne.s32.totalorder %s89, %s90
    %p102 = scmp.eq.s32.totalorder %s22, 1
    %p103 = por %p101, %p102
    %p105 = scmp.ne.s32.totalorder %s90, %s104
    %p106 = scmp.eq.s32.totalorder %s22, 0
    %p107 = por %p105, %p106
    %s109 = sadd.s32 %s108, 1
    %p112 = scmp.eq.s32.totalorder %s16, 1
    %p113 = scmp.ne.s32.totalorder %s108, %s110
    %p114 = scmp.eq.s32.totalorder %s16, 0
    %p115 = por %p113, %p114
    %p116 = scmp.ne.s32.totalorder %s108, %s110
    %p117 = scmp.eq.s32.totalorder %s21, 1
    %p118 = por %p116, %p117
    %p119 = scmp.ne.s32.totalorder %s110, %s111
    %p120 = scmp.eq.s32.totalorder %s21, 0
    %p121 = por %p119, %p120
    %p122 = scmp.ne.s32.totalorder %s110, %s111
    %p123 = scmp.eq.s32.totalorder %s22, 1
    %p124 = por %p122, %p123
    %p126 = scmp.ne.s32.totalorder %s111, %s125
    %p127 = scmp.eq.s32.totalorder %s22, 0
    %p128 = por %p126, %p127
    %s130 = sadd.s32 %s129, 1
    %p133 = scmp.eq.s32.totalorder %s16, 1
    %p134 = scmp.ne.s32.totalorder %s129, %s131
    %p135 = scmp.eq.s32.totalorder %s16, 0
    %p136 = por %p134, %p135
    %p137 = scmp.ne.s32.totalorder %s129, %s131
    %p138 = scmp.eq.s32.totalorder %s21, 1
    %p139 = por %p137, %p138
    %p140 = scmp.ne.s32.totalorder %s131, %s132
    %p141 = scmp.eq.s32.totalorder %s21, 0
    %p142 = por %p140, %p141
    %p143 = scmp.ne.s32.totalorder %s131, %s132
    %p144 = scmp.eq.s32.totalorder %s22, 1
    %p145 = por %p143, %p144
    %p147 = scmp.ne.s32.totalorder %s132, %s146
    %p148 = scmp.eq.s32.totalorder %s22, 0
    %p149 = por %p147, %p148
    %s151 = sadd.s32 %s150, 1
    %p154 = scmp.eq.s32.totalorder %s16, 1
    %p155 = scmp.ne.s32.totalorder %s150, %s152
    %p156 = scmp.eq.s32.totalorder %s16, 0
    %p157 = por %p155, %p156
    %p158 = scmp.ne.s32.totalorder %s150, %s152
    %p159 = scmp.eq.s32.totalorder %s21, 1
    %p160 = por %p158, %p159
    %p161 = scmp.ne.s32.totalorder %s152, %s153
    %p162 = scmp.eq.s32.totalorder %s21, 0
    %p163 = por %p161, %p162
    %p164 = scmp.ne.s32.totalorder %s152, %s153
    %p165 = scmp.eq.s32.totalorder %s22, 1
    %p166 = por %p164, %p165
    %p168 = scmp.ne.s32.totalorder %s153, %s167
    %p169 = scmp.eq.s32.totalorder %s22, 0
    %p170 = por %p168, %p169
    %s172 = sadd.s32 %s171, 1
    %p175 = scmp.eq.s32.totalorder %s16, 1
    %p176 = scmp.ne.s32.totalorder %s171, %s173
    %p177 = scmp.eq.s32.totalorder %s16, 0
    %p178 = por %p176, %p177
    %p179 = scmp.ne.s32.totalorder %s171, %s173
    %p180 = scmp.eq.s32.totalorder %s21, 1
    %p181 = por %p179, %p180
    %p182 = scmp.ne.s32.totalorder %s173, %s174
    %p183 = scmp.eq.s32.totalorder %s21, 0
    %p184 = por %p182, %p183
    %p185 = scmp.ne.s32.totalorder %s173, %s174
    %p186 = scmp.eq.s32.totalorder %s22, 1
    %p187 = por %p185, %p186
    %p189 = scmp.ne.s32.totalorder %s174, %s188
    %p190 = scmp.eq.s32.totalorder %s22, 0
    %p191 = por %p189, %p190
    %s192 = ssub.s32 %s16, %s23
    %p193 = scmp.eq.s32.totalorder %s192, 0
    %s195 = sadd.s32 %s194, 1
    %s196 = scalar_select %p193, %s194, %s195
    %p199 = pneg %p193
    %p200 = scmp.eq.s32.totalorder %s16, 1
    %p201 = por %p199, %p200
    %p202 = scmp.ne.s32.totalorder %s194, %s197
    %p203 = scmp.eq.s32.totalorder %s16, 0
    %p204 = por %p202, %p203
    %p205 = scmp.ne.s32.totalorder %s194, %s197
    %p206 = scmp.eq.s32.totalorder %s21, 1
    %p207 = por %p205, %p206
    %p208 = scmp.ne.s32.totalorder %s197, %s198
    %p209 = scmp.eq.s32.totalorder %s21, 0
    %p210 = por %p208, %p209
    %p211 = scmp.ne.s32.totalorder %s197, %s198
    %p212 = scmp.eq.s32.totalorder %s22, 1
    %p213 = por %p211, %p212
    %p215 = scmp.ne.s32.totalorder %s198, %s214
    %p216 = scmp.eq.s32.totalorder %s22, 0
    %p217 = por %p215, %p216
    %s218 = ssub.s32 %s16, %s23
    %p219 = scmp.eq.s32.totalorder %s218, 0
    %s221 = sadd.s32 %s220, 1
    %s222 = scalar_select %p219, %s220, %s221
    %p225 = pneg %p219
    %p226 = scmp.eq.s32.totalorder %s16, 1
    %p227 = por %p225, %p226
    %p228 = scmp.ne.s32.totalorder %s220, %s223
    %p229 = scmp.eq.s32.totalorder %s16, 0
    %p230 = por %p228, %p229
    %p231 = scmp.ne.s32.totalorder %s220, %s223
    %p232 = scmp.eq.s32.totalorder %s21, 1
    %p233 = por %p231, %p232
    %p234 = scmp.ne.s32.totalorder %s223, %s224
    %p235 = scmp.eq.s32.totalorder %s21, 0
    %p236 = por %p234, %p235
    %p237 = scmp.ne.s32.totalorder %s223, %s224
    %p238 = scmp.eq.s32.totalorder %s22, 1
    %p239 = por %p237, %p238
    %p241 = scmp.ne.s32.totalorder %s224, %s240
    %p242 = scmp.eq.s32.totalorder %s22, 0
    %p243 = por %p241, %p242
    %s244 = ssub.s32 %s16, %s23
    %p245 = scmp.eq.s32.totalorder %s244, 0
    %s247 = sadd.s32 %s246, 1
    %s248 = scalar_select %p245, %s246, %s247
    %p251 = pneg %p245
    %p252 = scmp.eq.s32.totalorder %s16, 1
    %p253 = por %p251, %p252
    %p254 = scmp.ne.s32.totalorder %s246, %s249
    %p255 = scmp.eq.s32.totalorder %s16, 0
    %p256 = por %p254, %p255
    %p257 = scmp.ne.s32.totalorder %s246, %s249
    %p258 = scmp.eq.s32.totalorder %s21, 1
    %p259 = por %p257, %p258
    %p260 = scmp.ne.s32.totalorder %s249, %s250
    %p261 = scmp.eq.s32.totalorder %s21, 0
    %p262 = por %p260, %p261
    %p263 = scmp.ne.s32.totalorder %s249, %s250
    %p264 = scmp.eq.s32.totalorder %s22, 1
    %p265 = por %p263, %p264
    %p267 = scmp.ne.s32.totalorder %s250, %s266
    %p268 = scmp.eq.s32.totalorder %s22, 0
    %p269 = por %p267, %p268
    %p270 = scmp.le.s32.totalorder 1, %s16
    %p271 = scmp.lt.s32.totalorder %s16, 3
    %p272 = pnand %p270, %p271
    %p273 = pneg %p272
    // Predicated region
    $region9: #{up_forward.1} parent=5 // pred_check
      _
    $region10: #{up_forward.1} parent=5 // pred_check_branch
      %275 = sbr.rel (%p272) target = $region12
    $region11: #{up_forward.1} parent=5 // pred_region
      %s276 = ssub.s32 %s16, 1
      // Predicated region
      $region13: #{up_forward.1} parent=11 // pred_check
        %p277 = pneg %p37
      $region14: #{up_forward.1} parent=11 // pred_check_branch
        %279 = sbr.rel (%p277) target = $region16
      $region15: #{up_forward.1} parent=11 // pred_region
        _
      $region16: #{up_forward.1} parent=11 // pred_fallthru
        _
      // Predicated region
      $region17: #{up_forward.1} parent=11 // pred_check
        %p280 = pneg %p58
      $region18: #{up_forward.1} parent=11 // pred_check_branch
        %282 = sbr.rel (%p280) target = $region20
      $region19: #{up_forward.1} parent=11 // pred_region
        _
      $region20: #{up_forward.1} parent=11 // pred_fallthru
        _
      // Predicated region
      $region21: #{up_forward.1} parent=11 // pred_check
        %p283 = pneg %p79
      $region22: #{up_forward.1} parent=11 // pred_check_branch
        %285 = sbr.rel (%p283) target = $region24
      $region23: #{up_forward.1} parent=11 // pred_region
        _
      $region24: #{up_forward.1} parent=11 // pred_fallthru
        _
      // Predicated region
      $region25: #{up_forward.1} parent=11 // pred_check
        %p286 = pneg %p100
      $region26: #{up_forward.1} parent=11 // pred_check_branch
        %288 = sbr.rel (%p286) target = $region28
      $region27: #{up_forward.1} parent=11 // pred_region
        _
      $region28: #{up_forward.1} parent=11 // pred_fallthru
        _
      // Predicated region
      $region29: #{up_forward.1} parent=11 // pred_check
        %p289 = pneg %p121
      $region30: #{up_forward.1} parent=11 // pred_check_branch
        %291 = sbr.rel (%p289) target = $region32
      $region31: #{up_forward.1} parent=11 // pred_region
        _
      $region32: #{up_forward.1} parent=11 // pred_fallthru
        _
      // Predicated region
      $region33: #{up_forward.1} parent=11 // pred_check
        %p292 = pneg %p142
      $region34: #{up_forward.1} parent=11 // pred_check_branch
        %294 = sbr.rel (%p292) target = $region36
      $region35: #{up_forward.1} parent=11 // pred_region
        _
      $region36: #{up_forward.1} parent=11 // pred_fallthru
        _
      // Predicated region
      $region37: #{up_forward.1} parent=11 // pred_check
        %p295 = pneg %p163
      $region38: #{up_forward.1} parent=11 // pred_check_branch
        %297 = sbr.rel (%p295) target = $region40
      $region39: #{up_forward.1} parent=11 // pred_region
        _
      $region40: #{up_forward.1} parent=11 // pred_fallthru
        _
      // Predicated region
      $region41: #{up_forward.1} parent=11 // pred_check
        %p298 = pneg %p184
      $region42: #{up_forward.1} parent=11 // pred_check_branch
        %300 = sbr.rel (%p298) target = $region44
      $region43: #{up_forward.1} parent=11 // pred_region
        _
      $region44: #{up_forward.1} parent=11 // pred_fallthru
        _
    $region12: #{up_forward.1} parent=5 // pred_fallthru
      _
    %p301 = scmp.lt.s32.totalorder %s16, 2
    // Predicated region
    $region45: #{up_forward.1} parent=5 // pred_check
      %p302 = pneg %p301
    $region46: #{up_forward.1} parent=5 // pred_check_branch
      %304 = sbr.rel (%p302) target = $region48
    $region47: #{up_forward.1} parent=5 // pred_region
      // Predicated region
      $region49: #{up_forward.1} parent=47 // pred_check
        %p305 = pneg %p204
      $region50: #{up_forward.1} parent=47 // pred_check_branch
        %307 = sbr.rel (%p305) target = $region52
      $region51: #{up_forward.1} parent=47 // pred_region
        %p308 = scmp.lt.s32.totalorder %s16, 1
        %s309 = scalar_select %p308, %s16, 1
        %s310 = smul.addr %s309, 2
        %s311 = smul.addr %s310, 4
        %s312 = scalar_lea.vmem %s8, %s311
      $region52: #{up_forward.1} parent=47 // pred_fallthru
        _
      // Predicated region
      $region53: #{up_forward.1} parent=47 // pred_check
        %p313 = pneg %p230
      $region54: #{up_forward.1} parent=47 // pred_check_branch
        %315 = sbr.rel (%p313) target = $region56
      $region55: #{up_forward.1} parent=47 // pred_region
        %p316 = scmp.lt.s32.totalorder %s16, 1
        %s317 = scalar_select %p316, %s16, 1
        %s318 = smul.addr %s317, 2
        %s319 = smul.addr %s318, 4
        %s320 = scalar_lea.vmem %s9, %s319
      $region56: #{up_forward.1} parent=47 // pred_fallthru
        _
    $region48: #{up_forward.1} parent=5 // pred_fallthru
      _
    %p321 = scmp.le.s32.totalorder 1, %s16
    %p322 = scmp.lt.s32.totalorder %s16, 3
    %p323 = pnand %p321, %p322
    %p324 = pneg %p323
    // Predicated region
    $region57: #{up_forward.1} parent=5 // pred_check
      _
    $region58: #{up_forward.1} parent=5 // pred_check_branch
      %326 = sbr.rel (%p323) target = $region60
    $region59: #{up_forward.1} parent=5 // pred_region
      %s327 = ssub.s32 %s16, 1
      %p328 = pneg %p37
      %p329 = pneg %p34
      %p330 = pneg %p58
      %p331 = pneg %p55
      %p332 = pneg %p79
      %p333 = pneg %p76
      %p334 = pneg %p100
      %p335 = pneg %p97
      %p336 = pneg %p121
      %p337 = pneg %p118
      %p338 = pneg %p142
      %p339 = pneg %p139
      %p340 = pneg %p163
      %p341 = pneg %p160
      %p342 = pneg %p184
      %p343 = pneg %p181
      %p344 = scmp.lt.s32.totalorder %s21, 1
      %s345 = scalar_select %p344, %s21, 1
      %s346 = smul.addr %s345, 2
      %s347 = smul.addr %s346, 4
      %s348 = scalar_lea.vmem %s8, %s347
      %p349 = pneg %p210
      %p350 = pneg %p207
      %p351 = scmp.lt.s32.totalorder %s21, 1
      %s352 = scalar_select %p351, %s21, 1
      %s353 = smul.addr %s352, 2
      %s354 = smul.addr %s353, 4
      %s355 = scalar_lea.vmem %s9, %s354
      %p356 = pneg %p236
      %p357 = pneg %p233
      %p358 = pneg %p262
      %p359 = pneg %p259
      %p360 = scmp.lt.s32.totalorder %s21, 1
      %s361 = scalar_select %p360, %s21, 1
      %s362 = smul.addr %s361, 2
      %s363 = smul.addr %s362, 8
      %s364 = scalar_lea.vmem %s10, %s363
      %p365 = scmp.lt.s32.totalorder %s21, 1
      %s366 = scalar_select %p365, %s21, 1
      %s367 = smul.addr %s366, 2
      %s368 = smul.addr %s367, 4
      %s369 = scalar_lea.vmem %s8, %s368
      %p370 = scmp.lt.s32.totalorder %s21, 1
      %s371 = scalar_select %p370, %s21, 1
      %s372 = smul.addr %s371, 2
      %s373 = smul.addr %s372, 4
      %s374 = scalar_lea.vmem %s9, %s373
      %p375 = scmp.lt.s32.totalorder %s21, 1
      %s376 = scalar_select %p375, %s21, 1
      %s377 = smul.addr %s376, 2
      %s378 = smul.addr %s377, 8
      %s379 = scalar_lea.vmem %s10, %s378
      %v380 = vlaneseq
      %v381 = vand.u32 %v380, 127
      %v382 = vadd.s32 %v381, 128
      %vm383 = vcmp.lt.s32.totalorder %v381, 0
      %v384 = vsub.s32 0, %v381
      %v385 = vsel %vm383, %v384, %v381
      %v386 = vshrl.u32 %v385, 4
      %v387 = vand.u32 %v385, 15
      %v388 = vsub.s32 0, %v387
      %v389 = vsel %vm383, %v388, %v387
      %vm390 = vcmp.lt.s32.totalorder %v382, 0
      %v391 = vsub.s32 0, %v382
      %v392 = vsel %vm390, %v391, %v382
      %v393 = vshrl.u32 %v392, 4
      %v394 = vand.u32 %v392, 15
      %v395 = vsub.s32 0, %v394
      %v396 = vsel %vm390, %v395, %v394
      %vm397 = vcmp.ne.s32.totalorder %v389, 0
      %vm398 = vcmp.ne.s32.totalorder %v396, 0
      %vm399 = vcmp.lt.s32.totalorder %v389, 0
      %vm400 = vcmp.lt.s32.totalorder %v396, 0
      %vm401 = vmand %vm399, %vm397
      %vm402 = vmand %vm400, %vm398
      %v403 = vadd.s32 %v389, 16
      %v404 = vadd.s32 %v396, 16
      %v405 = vsel %vm401, %v403, %v389
      %v406 = vsel %vm402, %v404, %v396
      %vm407 = vcmp.ne.s32.totalorder %v405, 0
      %vm408 = vcmp.ne.s32.totalorder %v406, 0
      %vm409 = vcmp.ne.s32.totalorder %v405, 15
      %vm410 = vcmp.ne.s32.totalorder %v406, 15
      %411 = vst [vmem:[#allocation2] sm:$0xff] 0.0
      %412 = vst [vmem:[#allocation2 + $0x8] sm:$0xff] 0.0
      %413 = vst [vmem:[#allocation2 + $0x10] sm:$0xff] 0.0
      %414 = vst [vmem:[#allocation2 + $0x18] sm:$0xff] 0.0
      %v415 = vld [vmem:[%s369] sm:$0xff]
      %v417 = vcombine.high %v415, %v415
      %419 = vst [vmem:[#allocation2 + $0x8] sm:$0xf] %v415
      %420 = vst [vmem:[#allocation2 + $0x10] sm:$0xf] %v417
      %v421 = vld [vmem:[%s374] sm:$0xff]
      %v423 = vcombine.low %v421, %v421
      %425 = vst [vmem:[#allocation2 + $0x8] sm:$0xf0] %v423
      %426 = vst [vmem:[#allocation2 + $0x10] sm:$0xf0] %v421
      %v427 = vld [vmem:[#allocation2] sm:$0xff]
      %v428 = vld [vmem:[#allocation2 + $0x8] sm:$0xff]
      %v429 = vld [vmem:[#allocation2 + $0x10] sm:$0xff]
      %v430 = vld [vmem:[#allocation2 + $0x18] sm:$0xff]
      %v431 = vld [vmem:[%s0] sm:$0xff]
      %v432 = vsel %vm407, 1, 0
      %v433 = vsel %vm408, 1, 0
      %vm434 = vcmp.eq.s32.totalorder %v432, 1
      %vm435 = vcmp.eq.s32.totalorder %v433, 1
      %439 = vrot.lane.b32.xlu0 %v427, 17
      %v440 = vpop.permute.xlu0 %439
      %441 = vrot.lane.b32.xlu0 %v428, 17
      %v442 = vpop.permute.xlu0 %441
      %443 = vrot.lane.b32.xlu0 %v429, 17
      %v444 = vpop.permute.xlu0 %443
      %vm445 = vcmask 138240
      %v446 = vsel %vm445, %v440, %v442
      %v447 = vsel %vm445, %v442, %v444
      %v450 = vsel %vm434, %v446, 0.0
      %v451 = vsel %vm435, %v447, 0.0
      %453 = vset.pattern.permute.xlu0 0
      %454 = vperm.xlu0 %453, %v431
      %v455 = vpop.permute.xlu0 %454
      %v457 = vmul.f32 %v455, %v450
      %v458 = vmul.f32 %v455, %v451
      %459 = vset.pattern.permute.xlu0 1
      %460 = vperm.xlu0 %459, %v431
      %v461 = vpop.permute.xlu0 %460
      %v463 = vmul.f32 %v461, %v427
      %v464 = vmul.f32 %v461, %v428
      %v465 = vmul.f32 %v461, %v429
      %469 = vrot.lane.b32.xlu0 %v463, 16
      %v470 = vpop.permute.xlu0 %469
      %471 = vrot.lane.b32.xlu0 %v464, 16
      %v472 = vpop.permute.xlu0 %471
      %473 = vrot.lane.b32.xlu0 %v465, 16
      %v474 = vpop.permute.xlu0 %473
      %vm475 = vcmask 130048
      %v476 = vsel %vm475, %v470, %v472
      %v477 = vsel %vm475, %v472, %v474
      %v480 = vadd.f32 %v457, %v476
      %v481 = vadd.f32 %v458, %v477
      %v482 = vsel %vm409, 1, 0
      %v483 = vsel %vm410, 1, 0
      %vm484 = vcmp.eq.s32.totalorder %v482, 1
      %vm485 = vcmp.eq.s32.totalorder %v483, 1
      %486 = vrot.lane.b32.xlu0 %v427, 15
      %v487 = vpop.permute.xlu0 %486
      %488 = vrot.lane.b32.xlu0 %v428, 15
      %v489 = vpop.permute.xlu0 %488
      %490 = vrot.lane.b32.xlu0 %v429, 15
      %v491 = vpop.permute.xlu0 %490
      %vm492 = vcmask 121856
      %v493 = vsel %vm492, %v487, %v489
      %v494 = vsel %vm492, %v489, %v491
      %v497 = vsel %vm484, %v493, 0.0
      %v498 = vsel %vm485, %v494, 0.0
      %499 = vset.pattern.permute.xlu0 2
      %500 = vperm.xlu0 %499, %v431
      %v501 = vpop.permute.xlu0 %500
      %v503 = vmul.f32 %v501, %v497
      %v504 = vmul.f32 %v501, %v498
      %v505 = vadd.f32 %v480, %v503
      %v506 = vadd.f32 %v481, %v504
      %507 = vrot.lane.b32.xlu0 %v427, 1
      %v508 = vpop.permute.xlu0 %507
      %509 = vrot.lane.b32.xlu0 %v428, 1
      %v510 = vpop.permute.xlu0 %509
      %511 = vrot.lane.b32.xlu0 %v429, 1
      %v512 = vpop.permute.xlu0 %511
      %vm513 = vcmask 7168
      %v514 = vsel %vm513, %v508, %v510
      %v515 = vsel %vm513, %v510, %v512
      %v518 = vsel %vm434, %v514, 0.0
      %v519 = vsel %vm435, %v515, 0.0
      %520 = vset.pattern.permute.xlu0 3
      %521 = vperm.xlu0 %520, %v431
      %v522 = vpop.permute.xlu0 %521
      %v524 = vmul.f32 %v522, %v518
      %v525 = vmul.f32 %v522, %v519
      %v526 = vadd.f32 %v505, %v524
      %v527 = vadd.f32 %v506, %v525
      %528 = vset.pattern.permute.xlu0 4
      %529 = vperm.xlu0 %528, %v431
      %v530 = vpop.permute.xlu0 %529
      %v532 = vmul.f32 %v530, %v428
      %v533 = vmul.f32 %v530, %v429
      %v534 = vadd.f32 %v526, %v532
      %v535 = vadd.f32 %v527, %v533
      %537 = vrot.lane.b32.xlu0 %v428, 127
      %v538 = vpop.permute.xlu0 %537
      %539 = vrot.lane.b32.xlu0 %v429, 127
      %v540 = vpop.permute.xlu0 %539
      %541 = vrot.lane.b32.xlu0 %v430, 127
      %v542 = vpop.permute.xlu0 %541
      %vm543 = vcmask 1039360
      %v544 = vsel %vm543, %v538, %v540
      %v545 = vsel %vm543, %v540, %v542
      %v548 = vsel %vm484, %v544, 0.0
      %v549 = vsel %vm485, %v545, 0.0
      %550 = vset.pattern.permute.xlu0 5
      %551 = vperm.xlu0 %550, %v431
      %v552 = vpop.permute.xlu0 %551
      %v554 = vmul.f32 %v552, %v548
      %v555 = vmul.f32 %v552, %v549
      %v556 = vadd.f32 %v534, %v554
      %v557 = vadd.f32 %v535, %v555
      %558 = vrot.lane.b32.xlu0 %v428, 113
      %v559 = vpop.permute.xlu0 %558
      %560 = vrot.lane.b32.xlu0 %v429, 113
      %v561 = vpop.permute.xlu0 %560
      %562 = vrot.lane.b32.xlu0 %v430, 113
      %v563 = vpop.permute.xlu0 %562
      %vm564 = vcmask 924672
      %v565 = vsel %vm564, %v559, %v561
      %v566 = vsel %vm564, %v561, %v563
      %v569 = vsel %vm434, %v565, 0.0
      %v570 = vsel %vm435, %v566, 0.0
      %571 = vset.pattern.permute.xlu0 6
      %572 = vperm.xlu0 %571, %v431
      %v573 = vpop.permute.xlu0 %572
      %v575 = vmul.f32 %v573, %v569
      %v576 = vmul.f32 %v573, %v570
      %v577 = vadd.f32 %v556, %v575
      %v578 = vadd.f32 %v557, %v576
      %579 = vset.pattern.permute.xlu0 7
      %580 = vperm.xlu0 %579, %v431
      %v581 = vpop.permute.xlu0 %580
      %v583 = vmul.f32 %v581, %v428
      %v584 = vmul.f32 %v581, %v429
      %v585 = vmul.f32 %v581, %v430
      %589 = vrot.lane.b32.xlu0 %v583, 112
      %v590 = vpop.permute.xlu0 %589
      %591 = vrot.lane.b32.xlu0 %v584, 112
      %v592 = vpop.permute.xlu0 %591
      %593 = vrot.lane.b32.xlu0 %v585, 112
      %v594 = vpop.permute.xlu0 %593
      %vm595 = vcmask 916480
      %v596 = vsel %vm595, %v590, %v592
      %v597 = vsel %vm595, %v592, %v594
      %v600 = vadd.f32 %v577, %v596
      %v601 = vadd.f32 %v578, %v597
      %602 = vrot.lane.b32.xlu0 %v428, 111
      %v603 = vpop.permute.xlu0 %602
      %604 = vrot.lane.b32.xlu0 %v429, 111
      %v605 = vpop.permute.xlu0 %604
      %606 = vrot.lane.b32.xlu0 %v430, 111
      %v607 = vpop.permute.xlu0 %606
      %vm608 = vcmask 908288
      %v609 = vsel %vm608, %v603, %v605
      %v610 = vsel %vm608, %v605, %v607
      %v613 = vsel %vm484, %v609, 0.0
      %v614 = vsel %vm485, %v610, 0.0
      %615 = vset.pattern.permute.xlu0 8
      %616 = vperm.xlu0 %615, %v431
      %v617 = vpop.permute.xlu0 %616
      %v619 = vmul.f32 %v617, %v613
      %v620 = vmul.f32 %v617, %v614
      %v621 = vadd.f32 %v600, %v619
      %v622 = vadd.f32 %v601, %v620
      %v623 = vld [vmem:[%s1] sm:$0xff]
      %625 = vset.pattern.permute.xlu0 0
      %626 = vperm.xlu0 %625, %v623
      %v627 = vpop.permute.xlu0 %626
      %v629 = vadd.f32 %v621, %v627
      %v630 = vadd.f32 %v622, %v627
      %v631 = vmax.f32 %v629, 0.0
      %v632 = vmax.f32 %v630, 0.0
      %v633 = vld [vmem:[%s2] sm:$0xf]
      %635 = vset.pattern.permute.xlu0 0
      %636 = vperm.xlu0 %635, %v633
      %v637 = vpop.permute.xlu0 %636
      %v639 = vlaneseq
      %v640 = vshrl.u32 %v639, 7
      %v641 = vsub.s32 0, %v640
      %v642 = vrot.slane %v631, %v641
      %v643 = vlaneseq
      %v644 = vshrl.u32 %v643, 7
      %v645 = vsub.s32 0, %v644
      %v646 = vrot.slane %v632, %v645
      %v647 = vmul.f32 %v637, %v642
      %v648 = vmul.f32 %v637, %v646
      %649 = vset.pattern.permute.xlu0 1
      %650 = vperm.xlu0 %649, %v633
      %v651 = vpop.permute.xlu0 %650
      %v653 = vlaneseq
      %v654 = vshrl.u32 %v653, 7
      %v655 = vsub.s32 1, %v654
      %v656 = vrot.slane %v631, %v655
      %v657 = vlaneseq
      %v658 = vshrl.u32 %v657, 7
      %v659 = vsub.s32 1, %v658
      %v660 = vrot.slane %v632, %v659
      %v661 = vmul.f32 %v651, %v656
      %v662 = vmul.f32 %v651, %v660
      %v663 = vadd.f32 %v647, %v661
      %v664 = vadd.f32 %v648, %v662
      %665 = vset.pattern.permute.xlu0 2
      %666 = vperm.xlu0 %665, %v633
      %v667 = vpop.permute.xlu0 %666
      %v669 = vlaneseq
      %v670 = vshrl.u32 %v669, 7
      %v671 = vsub.s32 2, %v670
      %v672 = vrot.slane %v631, %v671
      %v673 = vlaneseq
      %v674 = vshrl.u32 %v673, 7
      %v675 = vsub.s32 2, %v674
      %v676 = vrot.slane %v632, %v675
      %v677 = vmul.f32 %v667, %v672
      %v678 = vmul.f32 %v667, %v676
      %v679 = vadd.f32 %v663, %v677
      %v680 = vadd.f32 %v664, %v678
      %681 = vset.pattern.permute.xlu0 3
      %682 = vperm.xlu0 %681, %v633
      %v683 = vpop.permute.xlu0 %682
      %v685 = vlaneseq
      %v686 = vshrl.u32 %v685, 7
      %v687 = vsub.s32 3, %v686
      %v688 = vrot.slane %v631, %v687
      %v689 = vlaneseq
      %v690 = vshrl.u32 %v689, 7
      %v691 = vsub.s32 3, %v690
      %v692 = vrot.slane %v632, %v691
      %v693 = vmul.f32 %v683, %v688
      %v694 = vmul.f32 %v683, %v692
      %v695 = vadd.f32 %v679, %v693
      %v696 = vadd.f32 %v680, %v694
      %697 = vset.pattern.permute.xlu0 4
      %698 = vperm.xlu0 %697, %v633
      %v699 = vpop.permute.xlu0 %698
      %v701 = vlaneseq
      %v702 = vshrl.u32 %v701, 7
      %v703 = vsub.s32 4, %v702
      %v704 = vrot.slane %v631, %v703
      %v705 = vlaneseq
      %v706 = vshrl.u32 %v705, 7
      %v707 = vsub.s32 4, %v706
      %v708 = vrot.slane %v632, %v707
      %v709 = vmul.f32 %v699, %v704
      %v710 = vmul.f32 %v699, %v708
      %v711 = vadd.f32 %v695, %v709
      %v712 = vadd.f32 %v696, %v710
      %713 = vset.pattern.permute.xlu0 5
      %714 = vperm.xlu0 %713, %v633
      %v715 = vpop.permute.xlu0 %714
      %v717 = vlaneseq
      %v718 = vshrl.u32 %v717, 7
      %v719 = vsub.s32 5, %v718
      %v720 = vrot.slane %v631, %v719
      %v721 = vlaneseq
      %v722 = vshrl.u32 %v721, 7
      %v723 = vsub.s32 5, %v722
      %v724 = vrot.slane %v632, %v723
      %v725 = vmul.f32 %v715, %v720
      %v726 = vmul.f32 %v715, %v724
      %v727 = vadd.f32 %v711, %v725
      %v728 = vadd.f32 %v712, %v726
      %729 = vset.pattern.permute.xlu0 6
      %730 = vperm.xlu0 %729, %v633
      %v731 = vpop.permute.xlu0 %730
      %v733 = vlaneseq
      %v734 = vshrl.u32 %v733, 7
      %v735 = vsub.s32 6, %v734
      %v736 = vrot.slane %v631, %v735
      %v737 = vlaneseq
      %v738 = vshrl.u32 %v737, 7
      %v739 = vsub.s32 6, %v738
      %v740 = vrot.slane %v632, %v739
      %v741 = vmul.f32 %v731, %v736
      %v742 = vmul.f32 %v731, %v740
      %v743 = vadd.f32 %v727, %v741
      %v744 = vadd.f32 %v728, %v742
      %745 = vset.pattern.permute.xlu0 7
      %746 = vperm.xlu0 %745, %v633
      %v747 = vpop.permute.xlu0 %746
      %v749 = vlaneseq
      %v750 = vshrl.u32 %v749, 7
      %v751 = vsub.s32 7, %v750
      %v752 = vrot.slane %v631, %v751
      %v753 = vlaneseq
      %v754 = vshrl.u32 %v753, 7
      %v755 = vsub.s32 7, %v754
      %v756 = vrot.slane %v632, %v755
      %v757 = vmul.f32 %v747, %v752
      %v758 = vmul.f32 %v747, %v756
      %v759 = vadd.f32 %v743, %v757
      %v760 = vadd.f32 %v744, %v758
      %v761 = vld [vmem:[%s3] sm:$0xf]
      %763 = vset.pattern.permute.xlu0 0
      %764 = vperm.xlu0 %763, %v761
      %v765 = vpop.permute.xlu0 %764
      %v767 = vadd.f32 %v759, %v765
      %v768 = vadd.f32 %v760, %v765
      %v769 = vmax.f32 %v767, 0.0
      %v770 = vmax.f32 %v768, 0.0
      %771 = vst [vmem:[#allocation2 + $0x8] sm:$0xf] %v769
      %772 = vst [vmem:[#allocation2 + $0x10] sm:$0xf] %v770
      %v773 = vld [vmem:[#allocation2] sm:$0xf]
      %v774 = vld [vmem:[#allocation2 + $0x8] sm:$0xf]
      %v775 = vld [vmem:[#allocation2 + $0x10] sm:$0xf]
      %v776 = vld [vmem:[#allocation2 + $0x18] sm:$0xf]
      %v777 = vld [vmem:[%s4] sm:$0xf]
      %781 = vrot.lane.b32.xlu0 %v773, 17
      %v782 = vpop.permute.xlu0 %781
      %783 = vrot.lane.b32.xlu0 %v774, 17
      %v784 = vpop.permute.xlu0 %783
      %785 = vrot.lane.b32.xlu0 %v775, 17
      %v786 = vpop.permute.xlu0 %785
      %v787 = vsel %vm445, %v782, %v784
      %v788 = vsel %vm445, %v784, %v786
      %v791 = vsel %vm434, %v787, 0.0
      %v792 = vsel %vm435, %v788, 0.0
      %794 = vset.pattern.permute.xlu0 0
      %795 = vperm.xlu0 %794, %v777
      %v796 = vpop.permute.xlu0 %795
      %v798 = vmul.f32 %v796, %v791
      %v799 = vmul.f32 %v796, %v792
      %800 = vset.pattern.permute.xlu0 1
      %801 = vperm.xlu0 %800, %v777
      %v802 = vpop.permute.xlu0 %801
      %v804 = vmul.f32 %v802, %v773
      %v805 = vmul.f32 %v802, %v774
      %v806 = vmul.f32 %v802, %v775
      %810 = vrot.lane.b32.xlu0 %v804, 16
      %v811 = vpop.permute.xlu0 %810
      %812 = vrot.lane.b32.xlu0 %v805, 16
      %v813 = vpop.permute.xlu0 %812
      %814 = vrot.lane.b32.xlu0 %v806, 16
      %v815 = vpop.permute.xlu0 %814
      %v816 = vsel %vm475, %v811, %v813
      %v817 = vsel %vm475, %v813, %v815
      %v820 = vadd.f32 %v798, %v816
      %v821 = vadd.f32 %v799, %v817
      %822 = vrot.lane.b32.xlu0 %v773, 15
      %v823 = vpop.permute.xlu0 %822
      %824 = vrot.lane.b32.xlu0 %v774, 15
      %v825 = vpop.permute.xlu0 %824
      %826 = vrot.lane.b32.xlu0 %v775, 15
      %v827 = vpop.permute.xlu0 %826
      %v828 = vsel %vm492, %v823, %v825
      %v829 = vsel %vm492, %v825, %v827
      %v832 = vsel %vm484, %v828, 0.0
      %v833 = vsel %vm485, %v829, 0.0
      %834 = vset.pattern.permute.xlu0 2
      %835 = vperm.xlu0 %834, %v777
      %v836 = vpop.permute.xlu0 %835
      %v838 = vmul.f32 %v836, %v832
      %v839 = vmul.f32 %v836, %v833
      %v840 = vadd.f32 %v820, %v838
      %v841 = vadd.f32 %v821, %v839
      %842 = vrot.lane.b32.xlu0 %v773, 1
      %v843 = vpop.permute.xlu0 %842
      %844 = vrot.lane.b32.xlu0 %v774, 1
      %v845 = vpop.permute.xlu0 %844
      %846 = vrot.lane.b32.xlu0 %v775, 1
      %v847 = vpop.permute.xlu0 %846
      %v848 = vsel %vm513, %v843, %v845
      %v849 = vsel %vm513, %v845, %v847
      %v852 = vsel %vm434, %v848, 0.0
      %v853 = vsel %vm435, %v849, 0.0
      %854 = vset.pattern.permute.xlu0 3
      %855 = vperm.xlu0 %854, %v777
      %v856 = vpop.permute.xlu0 %855
      %v858 = vmul.f32 %v856, %v852
      %v859 = vmul.f32 %v856, %v853
      %v860 = vadd.f32 %v840, %v858
      %v861 = vadd.f32 %v841, %v859
      %862 = vset.pattern.permute.xlu0 4
      %863 = vperm.xlu0 %862, %v777
      %v864 = vpop.permute.xlu0 %863
      %v866 = vmul.f32 %v864, %v774
      %v867 = vmul.f32 %v864, %v775
      %v868 = vadd.f32 %v860, %v866
      %v869 = vadd.f32 %v861, %v867
      %871 = vrot.lane.b32.xlu0 %v774, 127
      %v872 = vpop.permute.xlu0 %871
      %873 = vrot.lane.b32.xlu0 %v775, 127
      %v874 = vpop.permute.xlu0 %873
      %875 = vrot.lane.b32.xlu0 %v776, 127
      %v876 = vpop.permute.xlu0 %875
      %v877 = vsel %vm543, %v872, %v874
      %v878 = vsel %vm543, %v874, %v876
      %v881 = vsel %vm484, %v877, 0.0
      %v882 = vsel %vm485, %v878, 0.0
      %883 = vset.pattern.permute.xlu0 5
      %884 = vperm.xlu0 %883, %v777
      %v885 = vpop.permute.xlu0 %884
      %v887 = vmul.f32 %v885, %v881
      %v888 = vmul.f32 %v885, %v882
      %v889 = vadd.f32 %v868, %v887
      %v890 = vadd.f32 %v869, %v888
      %891 = vrot.lane.b32.xlu0 %v774, 113
      %v892 = vpop.permute.xlu0 %891
      %893 = vrot.lane.b32.xlu0 %v775, 113
      %v894 = vpop.permute.xlu0 %893
      %895 = vrot.lane.b32.xlu0 %v776, 113
      %v896 = vpop.permute.xlu0 %895
      %v897 = vsel %vm564, %v892, %v894
      %v898 = vsel %vm564, %v894, %v896
      %v901 = vsel %vm434, %v897, 0.0
      %v902 = vsel %vm435, %v898, 0.0
      %903 = vset.pattern.permute.xlu0 6
      %904 = vperm.xlu0 %903, %v777
      %v905 = vpop.permute.xlu0 %904
      %v907 = vmul.f32 %v905, %v901
      %v908 = vmul.f32 %v905, %v902
      %v909 = vadd.f32 %v889, %v907
      %v910 = vadd.f32 %v890, %v908
      %911 = vset.pattern.permute.xlu0 7
      %912 = vperm.xlu0 %911, %v777
      %v913 = vpop.permute.xlu0 %912
      %v915 = vmul.f32 %v913, %v774
      %v916 = vmul.f32 %v913, %v775
      %v917 = vmul.f32 %v913, %v776
      %921 = vrot.lane.b32.xlu0 %v915, 112
      %v922 = vpop.permute.xlu0 %921
      %923 = vrot.lane.b32.xlu0 %v916, 112
      %v924 = vpop.permute.xlu0 %923
      %925 = vrot.lane.b32.xlu0 %v917, 112
      %v926 = vpop.permute.xlu0 %925
      %v927 = vsel %vm595, %v922, %v924
      %v928 = vsel %vm595, %v924, %v926
      %v931 = vadd.f32 %v909, %v927
      %v932 = vadd.f32 %v910, %v928
      %933 = vrot.lane.b32.xlu0 %v774, 111
      %v934 = vpop.permute.xlu0 %933
      %935 = vrot.lane.b32.xlu0 %v775, 111
      %v936 = vpop.permute.xlu0 %935
      %937 = vrot.lane.b32.xlu0 %v776, 111
      %v938 = vpop.permute.xlu0 %937
      %v939 = vsel %vm608, %v934, %v936
      %v940 = vsel %vm608, %v936, %v938
      %v943 = vsel %vm484, %v939, 0.0
      %v944 = vsel %vm485, %v940, 0.0
      %945 = vset.pattern.permute.xlu0 8
      %946 = vperm.xlu0 %945, %v777
      %v947 = vpop.permute.xlu0 %946
      %v949 = vmul.f32 %v947, %v943
      %v950 = vmul.f32 %v947, %v944
      %v951 = vadd.f32 %v931, %v949
      %v952 = vadd.f32 %v932, %v950
      %v953 = vld [vmem:[%s5] sm:$0xf]
      %955 = vset.pattern.permute.xlu0 0
      %956 = vperm.xlu0 %955, %v953
      %v957 = vpop.permute.xlu0 %956
      %v959 = vadd.f32 %v951, %v957
      %v960 = vadd.f32 %v952, %v957
      %v961 = vmax.f32 %v959, 0.0
      %v962 = vmax.f32 %v960, 0.0
      %v963 = vld [vmem:[%s6] sm:$0xff]
      %965 = vset.pattern.permute.xlu0 0
      %966 = vperm.xlu0 %965, %v963
      %v967 = vpop.permute.xlu0 %966
      %v969 = vlaneseq
      %v970 = vshrl.u32 %v969, 7
      %v971 = vsub.s32 0, %v970
      %v972 = vrot.slane %v961, %v971
      %v973 = vlaneseq
      %v974 = vshrl.u32 %v973, 7
      %v975 = vsub.s32 0, %v974
      %v976 = vrot.slane %v962, %v975
      %v977 = vmul.f32 %v967, %v972
      %v978 = vmul.f32 %v967, %v976
      %979 = vset.pattern.permute.xlu0 1
      %980 = vperm.xlu0 %979, %v963
      %v981 = vpop.permute.xlu0 %980
      %v983 = vlaneseq
      %v984 = vshrl.u32 %v983, 7
      %v985 = vsub.s32 1, %v984
      %v986 = vrot.slane %v961, %v985
      %v987 = vlaneseq
      %v988 = vshrl.u32 %v987, 7
      %v989 = vsub.s32 1, %v988
      %v990 = vrot.slane %v962, %v989
      %v991 = vmul.f32 %v981, %v986
      %v992 = vmul.f32 %v981, %v990
      %v993 = vadd.f32 %v977, %v991
      %v994 = vadd.f32 %v978, %v992
      %995 = vset.pattern.permute.xlu0 2
      %996 = vperm.xlu0 %995, %v963
      %v997 = vpop.permute.xlu0 %996
      %v999 = vlaneseq
      %v1000 = vshrl.u32 %v999, 7
      %v1001 = vsub.s32 2, %v1000
      %v1002 = vrot.slane %v961, %v1001
      %v1003 = vlaneseq
      %v1004 = vshrl.u32 %v1003, 7
      %v1005 = vsub.s32 2, %v1004
      %v1006 = vrot.slane %v962, %v1005
      %v1007 = vmul.f32 %v997, %v1002
      %v1008 = vmul.f32 %v997, %v1006
      %v1009 = vadd.f32 %v993, %v1007
      %v1010 = vadd.f32 %v994, %v1008
      %1011 = vset.pattern.permute.xlu0 3
      %1012 = vperm.xlu0 %1011, %v963
      %v1013 = vpop.permute.xlu0 %1012
      %v1015 = vlaneseq
      %v1016 = vshrl.u32 %v1015, 7
      %v1017 = vsub.s32 3, %v1016
      %v1018 = vrot.slane %v961, %v1017
      %v1019 = vlaneseq
      %v1020 = vshrl.u32 %v1019, 7
      %v1021 = vsub.s32 3, %v1020
      %v1022 = vrot.slane %v962, %v1021
      %v1023 = vmul.f32 %v1013, %v1018
      %v1024 = vmul.f32 %v1013, %v1022
      %v1025 = vadd.f32 %v1009, %v1023
      %v1026 = vadd.f32 %v1010, %v1024
      %v1027 = vld [vmem:[%s7] sm:$0xff]
      %1029 = vset.pattern.permute.xlu0 0
      %1030 = vperm.xlu0 %1029, %v1027
      %v1031 = vpop.permute.xlu0 %1030
      %v1033 = vadd.f32 %v1025, %v1031
      %v1034 = vadd.f32 %v1026, %v1031
      %v1035 = vmax.f32 %v1033, 0.0
      %v1036 = vmax.f32 %v1034, 0.0
      %1037 = vst [vmem:[%s379] sm:$0xff] %v1035
      %1038 = vst [vmem:[%s379 + $0x8] sm:$0xff] %v1036
      %p1039 = scmp.lt.s32.totalorder %s21, 1
      %s1040 = scalar_select %p1039, %s21, 1
      %s1041 = smul.addr %s1040, 2
      %s1042 = smul.addr %s1041, 8
      %s1043 = scalar_lea.vmem %s10, %s1042
      // Predicated region
      $region61: #{up_forward.1} parent=59 // pred_check
        %p1044 = pneg %p259
      $region62: #{up_forward.1} parent=59 // pred_check_branch
        %1046 = sbr.rel (%p1044) target = $region64
      $region63: #{up_forward.1} parent=59 // pred_region
        _
      $region64: #{up_forward.1} parent=59 // pred_fallthru
        _
    $region60: #{up_forward.1} parent=5 // pred_fallthru
      _
    %p1047 = scmp.le.s32.totalorder 2, %s16
    // Predicated region
    $region65: #{up_forward.1} parent=5 // pred_check
      %p1048 = pneg %p1047
    $region66: #{up_forward.1} parent=5 // pred_check_branch
      %1050 = sbr.rel (%p1048) target = $region68
    $region67: #{up_forward.1} parent=5 // pred_region
      %s1051 = ssub.s32 %s16, 2
      // Predicated region
      $region69: #{up_forward.1} parent=67 // pred_check
        %p1052 = pneg %p265
      $region70: #{up_forward.1} parent=67 // pred_check_branch
        %1054 = sbr.rel (%p1052) target = $region72
      $region71: #{up_forward.1} parent=67 // pred_region
        %p1055 = scmp.lt.s32.totalorder %s22, 1
        %s1056 = scalar_select %p1055, %s22, 1
        %s1057 = smul.addr %s1056, 2
        %s1058 = smul.addr %s1057, 8
        %s1059 = scalar_lea.vmem %s10, %s1058
      $region72: #{up_forward.1} parent=67 // pred_fallthru
        _
    $region68: #{up_forward.1} parent=5 // pred_fallthru
      _
  $region6: #{up_forward.1} parent=0 // loop_footer
    %s20 = sadd.s32 1, %s16
  $region7: #{up_forward.1} parent=0 // loop_footer_branch
    %15 = sbr.rel target = $region3
  $region8: #{up_forward.1} parent=0 // loop_exit
    _

</llo_original>
